<compile_context>
chip_gen: v7x
topology: tpu7x:2x2x1
jax: 0.10.0
libtpu: 0.0.40
codegen_flags: <defaults>
</compile_context>

<pallas_src>
import jax
import jax.numpy as jnp
from jax.experimental import pallas as pl
from jax.experimental.pallas import tpu as pltpu

LN_EPS = 1e-5  # torch.nn.LayerNorm default


def _layernorm(x, gamma, beta):
    mu = jnp.mean(x, axis=-1, keepdims=True)
    var = jnp.mean((x - mu) ** 2, axis=-1, keepdims=True)
    return (x - mu) * jax.lax.rsqrt(var + LN_EPS) * gamma + beta


def _gelu(x):
    # exact GELU (erf-based), matches torch.nn.GELU() default
    # TODO(synk): tanh-approx GELU (rides the EUP slot) only if the product accepts
    # torch GELU(approximate='tanh') numerics.
    return 0.5 * x * (1.0 + jax.lax.erf(x * (1.0 / jnp.sqrt(2.0).astype(x.dtype))))


def graph_component_kernel(x_ref, adj_ref, vecs_ref, w_ref, out_ref):
    """Gridless forward for B graphs block-stacked along rows.

    x_ref    : (B*N, C)     f32  node features, graphs stacked along rows
    adj_ref  : (B, N, N)    f32  GCN-normalized dense adjacency per graph
    vecs_ref : (8, 4C)      f32  packed row-vector params
               rows: 0 ln1_g | 1 ln1_b | 2 b_conv | 3 ln2_g | 4 ln2_b
                     5 b2 (first C cols) | 6 b1 (full 4C) | 7 pad
    w_ref    : (C, 2*4C+C)  bf16 packed weights: [ W1 (C,4C) | W2^T (C,4C) | W_conv (C,C) ]
    out_ref  : (B*N, C)
    """
    C = x_ref.shape[-1]
    H = 4 * C
    B, N, _ = adj_ref.shape
    bf16 = jnp.bfloat16
    f32 = jnp.float32

    x = x_ref[...]

    ln1_g = vecs_ref[0:1, 0:C]
    ln1_b = vecs_ref[1:2, 0:C]
    b_conv = vecs_ref[2:3, 0:C]
    ln2_g = vecs_ref[3:4, 0:C]
    ln2_b = vecs_ref[4:5, 0:C]
    b2 = vecs_ref[5:6, 0:C]
    b1 = vecs_ref[6:7, :]                       # (1, H)

    w1 = w_ref[:, 0:H]                          # (C, H)  bf16, lane-tile aligned
    w2t = w_ref[:, H:2 * H]                     # (C, H)  bf16 == W2^T
    w_conv = w_ref[:, 2 * H:2 * H + C]          # (C, C)  bf16

    # ---- DeepGCNLayer 'res+':  x + Ahat @ (gelu(LN1(x)) @ W_conv) + b_conv
    # TODO(synk): dropout layers are identity (inference mode).
    h = _gelu(_layernorm(x, ln1_g, ln1_b))
    h = jnp.dot(h.astype(bf16), w_conv, preferred_element_type=f32)        # (B*N, C)
    # Neighbourhood aggregation kept fully in f32 (adjacency never cast to bf16);
    # MXU is idle at these shapes so the extra-pass f32 matmul is free and it
    # removes the double-bf16-rounding drift.  Row-split reshape is (8,128)-tile
    # aligned (N multiple of 8), so it is layout-neutral.
    agg = jnp.einsum('bij,bjc->bic', adj_ref[...], h.reshape(B, N, C),
                     preferred_element_type=f32).reshape(B * N, C)
    conv_feat = x + agg + b_conv

    # ---- FFN: LN2 -> Linear(C,4C) -> GELU -> Linear(4C,C) -> GELU
    y = _layernorm(conv_feat, ln2_g, ln2_b)
    y = _gelu(jnp.dot(y.astype(bf16), w1, preferred_element_type=f32) + b1)
    # y @ W2 via transposed contraction (no in-kernel transpose of the W2^T slab).
    y = jax.lax.dot_general(y.astype(bf16), w2t,
                            dimension_numbers=(((1,), (1,)), ((), ())),
                            preferred_element_type=f32) + b2               # (B*N, C)
    y = _gelu(y)

    # Single contiguous (B*N, C) store.
    # TODO(synk): a lane-dense (N, B*C) output layout was skipped to preserve the
    # module's (B, N, C) interface.
    out_ref[...] = (x + y).astype(out_ref.dtype)


def pack_params(params, C):
    """Host-side, once per model: pack 10 small tensors into two slabs.

    The weight slab is pre-cast to bf16 here so the kernel never casts
    grid-invariant operands.
    """
    H = 4 * C
    vecs = jnp.zeros((8, H), jnp.float32)
    vecs = vecs.at[0, :C].set(params["ln1_g"].reshape(-1))
    vecs = vecs.at[1, :C].set(params["ln1_b"].reshape(-1))
    vecs = vecs.at[2, :C].set(params["b_conv"].reshape(-1))
    vecs = vecs.at[3, :C].set(params["ln2_g"].reshape(-1))
    vecs = vecs.at[4, :C].set(params["ln2_b"].reshape(-1))
    vecs = vecs.at[5, :C].set(params["b2"].reshape(-1))
    vecs = vecs.at[6, :].set(params["b1"].reshape(-1))

    w_all = jnp.zeros((C, 2 * H + C), jnp.float32)
    w_all = w_all.at[:, 0:H].set(params["w1"])
    w_all = w_all.at[:, H:2 * H].set(params["w2"].T)
    w_all = w_all.at[:, 2 * H:2 * H + C].set(params["w_conv"])
    return vecs, w_all.astype(jnp.bfloat16)


@jax.jit
def graph_component_forward(x, adj, vecs, w_all):
    """x: [N,C] or [B,N,C] f32; adj: [N,N] or [B,N,N] f32 (dense GCN-normalized).

    vecs / w_all come from pack_params (host-side, once).
    """
    squeeze = (x.ndim == 2)
    if squeeze:
        x, adj = x[None], adj[None]
    B, N, C = x.shape

    vmem = pl.BlockSpec(memory_space=pltpu.MemorySpace.VMEM)
    out = pl.pallas_call(
        graph_component_kernel,
        out_shape=jax.ShapeDtypeStruct((B * N, C), x.dtype),
        in_specs=[vmem, vmem, vmem, vmem],
        out_specs=vmem,
    )(x.reshape(B * N, C), adj, vecs, w_all)
    # TODO(synk): for N >~ 2.8k the dense N^2 adjacency exceeds v7x's default scoped
    # VMEM; at that point tile the aggregation over row blocks via BlockSpec.
    out = out.reshape(B, N, C)
    return out[0] if squeeze else out


def build_gcn_adj(edge_index, num_nodes):
    """Dense GCN-normalized adjacency D^-1/2 (A + I) D^-1/2, messages src->dst.

    Duplicate edges are counted (scatter-add), matching PyG GCNConv semantics.
    """
    src, dst = edge_index[0], edge_index[1]
    a = jnp.zeros((num_nodes, num_nodes), jnp.float32).at[dst, src].add(1.0)
    a = a + jnp.eye(num_nodes, dtype=jnp.float32)       # add self loops
    deg = a.sum(axis=1)
    dinv = jnp.where(deg > 0, jax.lax.rsqrt(deg), 0.0)
    return a * dinv[:, None] * dinv[None, :]


def reference_forward(x, adj, p):
    """Pure f32 JAX reference of the module math."""
    h = _gelu(_layernorm(x, p["ln1_g"], p["ln1_b"]))
    h = adj @ (h @ p["w_conv"]) + p["b_conv"]
    conv_feat = x + h
    y = _layernorm(conv_feat, p["ln2_g"], p["ln2_b"])
    y = _gelu(y @ p["w1"] + p["b1"])
    y = _gelu(y @ p["w2"] + p["b2"])
    return x + y


def reference_forward_bf16(x, adj, p):
    """Reference mimicking the kernel's numerics: bf16 weight matmuls with f32
    accumulation, f32 adjacency aggregation, f32 elementwise math."""
    bf = jnp.bfloat16
    f32 = jnp.float32
    h = _gelu(_layernorm(x, p["ln1_g"], p["ln1_b"]))
    h = jnp.dot(h.astype(bf), p["w_conv"].astype(bf), preferred_element_type=f32)
    h = jnp.dot(adj, h, preferred_element_type=f32)
    conv_feat = x + h + p["b_conv"]
    y = _layernorm(conv_feat, p["ln2_g"], p["ln2_b"])
    y = _gelu(jnp.dot(y.astype(bf), p["w1"].astype(bf), preferred_element_type=f32) + p["b1"])
    y = _gelu(jnp.dot(y.astype(bf), p["w2"].astype(bf), preferred_element_type=f32) + p["b2"])
    return x + y


def init_params(key, C):
    H = 4 * C
    k = jax.random.split(key, 6)
    s_c = 1.0 / jnp.sqrt(C)
    s_h = 1.0 / jnp.sqrt(H)
    return {
        # LayerNorm inside DeepGCNLayer
        "ln1_g": jnp.ones((1, C), jnp.float32),
        "ln1_b": jnp.zeros((1, C), jnp.float32),
        # GCNConv weight / bias (out_channels == in_channels, required by res+)
        "w_conv": jax.random.uniform(k[0], (C, C), jnp.float32, -s_c, s_c),
        "b_conv": jax.random.uniform(k[1], (1, C), jnp.float32, -s_c, s_c),
        # FFN
        "ln2_g": jnp.ones((1, C), jnp.float32),
        "ln2_b": jnp.zeros((1, C), jnp.float32),
        "w1": jax.random.uniform(k[2], (C, H), jnp.float32, -s_c, s_c),
        "b1": jax.random.uniform(k[3], (1, H), jnp.float32, -s_c, s_c),
        "w2": jax.random.uniform(k[4], (H, C), jnp.float32, -s_h, s_h),
        "b2": jax.random.uniform(k[5], (1, C), jnp.float32, -s_h, s_h),
    }


if __name__ == "__main__":
    key = jax.random.PRNGKey(0)
    N, C, E, B = 64, 32, 128, 4          # nodes, out_channels, edges, graph batch
    kx, ke, kp = jax.random.split(key, 3)

    node_feat = jax.random.normal(kx, (B, N, C), jnp.float32)
    edge_keys = jax.random.split(ke, B)
    adjs = jnp.stack([
        build_gcn_adj(jax.random.randint(edge_keys[b], (2, E), 0, N), N)
        for b in range(B)
    ])
    params = init_params(kp, C)
    vecs, w_all = pack_params(params, C)   # host-side, once (weights pre-cast bf16)

    # ---- batched path: one gridless pallas_call on block-stacked graphs
    out = graph_component_forward(node_feat, adjs, vecs, w_all)
    out = jax.block_until_ready(out)
    assert out.shape == (B, N, C)

    ref_bf = jax.vmap(lambda x, a: reference_forward_bf16(x, a, params))(node_feat, adjs)
    ref_32 = jax.vmap(lambda x, a: reference_forward(x, a, params))(node_feat, adjs)
    assert jnp.allclose(out, ref_bf, atol=5e-3, rtol=5e-3), "mismatch vs bf16-matmul reference"
    assert jnp.allclose(out, ref_32, atol=5e-2, rtol=5e-2), "mismatch vs f32 reference"

    # ---- single-graph path (module signature), also gridless
    out1 = jax.block_until_ready(
        graph_component_forward(node_feat[0], adjs[0], vecs, w_all))
    assert out1.shape == (N, C)
    assert jnp.allclose(out1, ref_bf[0], atol=5e-3, rtol=5e-3), "single-graph mismatch"

    print("KERNEL_OK")
</pallas_src>

<mosaic_0001>
module attributes {stable_mosaic.version = 11 : i64} {
  func.func @graph_component_kernel(%arg0: memref<256x32xf32, #tpu.memory_space<vmem>>, %arg1: memref<4x64x64xf32, #tpu.memory_space<vmem>>, %arg2: memref<8x128xf32, #tpu.memory_space<vmem>>, %arg3: memref<32x288xbf16, #tpu.memory_space<vmem>>, %arg4: memref<256x32xf32, #tpu.memory_space<vmem>>) attributes {dimension_semantics = [], scalar_prefetch = 0 : i64, scratch_operands = 0 : i64, tpu.core_type = #tpu.core_type<tc>} {
    %c0 = arith.constant 0 : index
    %c0_0 = arith.constant 0 : index
    %0 = vector.load %arg0[%c0, %c0_0] : memref<256x32xf32, #tpu.memory_space<vmem>>, vector<256x32xf32>
    %c0_1 = arith.constant 0 : index
    %c0_2 = arith.constant 0 : index
    %1 = vector.load %arg2[%c0_1, %c0_2] : memref<8x128xf32, #tpu.memory_space<vmem>>, vector<1x32xf32>
    %c1 = arith.constant 1 : index
    %c0_3 = arith.constant 0 : index
    %2 = vector.load %arg2[%c1, %c0_3] : memref<8x128xf32, #tpu.memory_space<vmem>>, vector<1x32xf32>
    %c2 = arith.constant 2 : index
    %c0_4 = arith.constant 0 : index
    %3 = vector.load %arg2[%c2, %c0_4] : memref<8x128xf32, #tpu.memory_space<vmem>>, vector<1x32xf32>
    %c3 = arith.constant 3 : index
    %c0_5 = arith.constant 0 : index
    %4 = vector.load %arg2[%c3, %c0_5] : memref<8x128xf32, #tpu.memory_space<vmem>>, vector<1x32xf32>
    %c4 = arith.constant 4 : index
    %c0_6 = arith.constant 0 : index
    %5 = vector.load %arg2[%c4, %c0_6] : memref<8x128xf32, #tpu.memory_space<vmem>>, vector<1x32xf32>
    %c5 = arith.constant 5 : index
    %c0_7 = arith.constant 0 : index
    %6 = vector.load %arg2[%c5, %c0_7] : memref<8x128xf32, #tpu.memory_space<vmem>>, vector<1x32xf32>
    %c6 = arith.constant 6 : index
    %c0_8 = arith.constant 0 : index
    %7 = vector.load %arg2[%c6, %c0_8] : memref<8x128xf32, #tpu.memory_space<vmem>>, vector<1x128xf32>
    %c0_9 = arith.constant 0 : index
    %c0_10 = arith.constant 0 : index
    %8 = vector.load %arg3[%c0_9, %c0_10] : memref<32x288xbf16, #tpu.memory_space<vmem>>, vector<32x128xbf16>
    %c0_11 = arith.constant 0 : index
    %c128 = arith.constant 128 : index
    %9 = vector.load %arg3[%c0_11, %c128] : memref<32x288xbf16, #tpu.memory_space<vmem>>, vector<32x128xbf16>
    %c0_12 = arith.constant 0 : index
    %c256 = arith.constant 256 : index
    %10 = vector.load %arg3[%c0_12, %c256] : memref<32x288xbf16, #tpu.memory_space<vmem>>, vector<32x32xbf16>
    %cst = arith.constant dense<0.000000e+00> : vector<256xf32>
    %11 = vector.multi_reduction <add>, %0, %cst [1] : vector<256x32xf32> to vector<256xf32>
    %12 = vector.shape_cast %11 : vector<256xf32> to vector<256x1xf32>
    %cst_13 = arith.constant 3.200000e+01 : f32
    %13 = vector.broadcast %cst_13 : f32 to vector<256x1xf32>
    %14 = arith.divf %12, %13 : vector<256x1xf32>
    %15 = vector.broadcast %14 : vector<256x1xf32> to vector<256x32xf32>
    %16 = arith.subf %0, %15 : vector<256x32xf32>
    %17 = arith.mulf %16, %16 : vector<256x32xf32>
    %cst_14 = arith.constant dense<0.000000e+00> : vector<256xf32>
    %18 = vector.multi_reduction <add>, %17, %cst_14 [1] : vector<256x32xf32> to vector<256xf32>
    %19 = vector.shape_cast %18 : vector<256xf32> to vector<256x1xf32>
    %cst_15 = arith.constant 3.200000e+01 : f32
    %20 = vector.broadcast %cst_15 : f32 to vector<256x1xf32>
    %21 = arith.divf %19, %20 : vector<256x1xf32>
    %22 = vector.broadcast %14 : vector<256x1xf32> to vector<256x32xf32>
    %23 = arith.subf %0, %22 : vector<256x32xf32>
    %cst_16 = arith.constant 9.99999974E-6 : f32
    %24 = vector.broadcast %cst_16 : f32 to vector<256x1xf32>
    %25 = arith.addf %21, %24 : vector<256x1xf32>
    %26 = math.rsqrt %25 : vector<256x1xf32>
    %27 = vector.broadcast %26 : vector<256x1xf32> to vector<256x32xf32>
    %28 = arith.mulf %23, %27 : vector<256x32xf32>
    %29 = vector.broadcast %1 : vector<1x32xf32> to vector<256x32xf32>
    %30 = arith.mulf %28, %29 : vector<256x32xf32>
    %31 = vector.broadcast %2 : vector<1x32xf32> to vector<256x32xf32>
    %32 = arith.addf %30, %31 : vector<256x32xf32>
    %cst_17 = arith.constant 5.000000e-01 : f32
    %33 = vector.broadcast %cst_17 : f32 to vector<256x32xf32>
    %34 = arith.mulf %33, %32 : vector<256x32xf32>
    %cst_18 = arith.constant 2.000000e+00 : f32
    %35 = math.sqrt %cst_18 : f32
    %cst_19 = arith.constant 1.000000e+00 : f32
    %36 = arith.divf %cst_19, %35 : f32
    %37 = vector.broadcast %36 : f32 to vector<256x32xf32>
    %38 = arith.mulf %32, %37 : vector<256x32xf32>
    %39 = math.erf %38 : vector<256x32xf32>
    %cst_20 = arith.constant 1.000000e+00 : f32
    %40 = vector.broadcast %cst_20 : f32 to vector<256x32xf32>
    %41 = arith.addf %40, %39 : vector<256x32xf32>
    %42 = arith.mulf %34, %41 : vector<256x32xf32>
    %43 = arith.truncf %42 : vector<256x32xf32> to vector<256x32xbf16>
    %cst_21 = arith.constant dense<0.000000e+00> : vector<256x32xf32>
    %44 = tpu.matmul %43, %10, %cst_21 {dimension_numbers = #tpu.dot_dimension_numbers<[1], [0], [0], [1], [0, 0, 1, 1], [], []>} : vector<256x32xbf16>, vector<32x32xbf16>, vector<256x32xf32> -> vector<256x32xf32>
    %c0_22 = arith.constant 0 : index
    %c0_23 = arith.constant 0 : index
    %c0_24 = arith.constant 0 : index
    %45 = vector.load %arg1[%c0_22, %c0_23, %c0_24] : memref<4x64x64xf32, #tpu.memory_space<vmem>>, vector<4x64x64xf32>
    %46 = vector.shape_cast %44 : vector<256x32xf32> to vector<4x64x32xf32>
    "tpu.trace_start"() <{level = 10 : i32, message = "bij,bjc->bic"}> : () -> ()
    %cst_25 = arith.constant dense<0.000000e+00> : vector<4x64x32xf32>
    %47 = tpu.matmul %45, %46, %cst_25 {dimension_numbers = #tpu.dot_dimension_numbers<[2], [1], [1], [2], [0, 0, 0, 1, 1, 2], [0], [0]>} : vector<4x64x64xf32>, vector<4x64x32xf32>, vector<4x64x32xf32> -> vector<4x64x32xf32>
    "tpu.trace_stop"() : () -> ()
    %48 = vector.shape_cast %47 : vector<4x64x32xf32> to vector<256x32xf32>
    %49 = arith.addf %0, %48 : vector<256x32xf32>
    %50 = vector.broadcast %3 : vector<1x32xf32> to vector<256x32xf32>
    %51 = arith.addf %49, %50 : vector<256x32xf32>
    %cst_26 = arith.constant dense<0.000000e+00> : vector<256xf32>
    %52 = vector.multi_reduction <add>, %51, %cst_26 [1] : vector<256x32xf32> to vector<256xf32>
    %53 = vector.shape_cast %52 : vector<256xf32> to vector<256x1xf32>
    %cst_27 = arith.constant 3.200000e+01 : f32
    %54 = vector.broadcast %cst_27 : f32 to vector<256x1xf32>
    %55 = arith.divf %53, %54 : vector<256x1xf32>
    %56 = vector.broadcast %55 : vector<256x1xf32> to vector<256x32xf32>
    %57 = arith.subf %51, %56 : vector<256x32xf32>
    %58 = arith.mulf %57, %57 : vector<256x32xf32>
    %cst_28 = arith.constant dense<0.000000e+00> : vector<256xf32>
    %59 = vector.multi_reduction <add>, %58, %cst_28 [1] : vector<256x32xf32> to vector<256xf32>
    %60 = vector.shape_cast %59 : vector<256xf32> to vector<256x1xf32>
    %cst_29 = arith.constant 3.200000e+01 : f32
    %61 = vector.broadcast %cst_29 : f32 to vector<256x1xf32>
    %62 = arith.divf %60, %61 : vector<256x1xf32>
    %63 = vector.broadcast %55 : vector<256x1xf32> to vector<256x32xf32>
    %64 = arith.subf %51, %63 : vector<256x32xf32>
    %cst_30 = arith.constant 9.99999974E-6 : f32
    %65 = vector.broadcast %cst_30 : f32 to vector<256x1xf32>
    %66 = arith.addf %62, %65 : vector<256x1xf32>
    %67 = math.rsqrt %66 : vector<256x1xf32>
    %68 = vector.broadcast %67 : vector<256x1xf32> to vector<256x32xf32>
    %69 = arith.mulf %64, %68 : vector<256x32xf32>
    %70 = vector.broadcast %4 : vector<1x32xf32> to vector<256x32xf32>
    %71 = arith.mulf %69, %70 : vector<256x32xf32>
    %72 = vector.broadcast %5 : vector<1x32xf32> to vector<256x32xf32>
    %73 = arith.addf %71, %72 : vector<256x32xf32>
    %74 = arith.truncf %73 : vector<256x32xf32> to vector<256x32xbf16>
    %cst_31 = arith.constant dense<0.000000e+00> : vector<256x128xf32>
    %75 = tpu.matmul %74, %8, %cst_31 {dimension_numbers = #tpu.dot_dimension_numbers<[1], [0], [0], [1], [0, 0, 1, 1], [], []>} : vector<256x32xbf16>, vector<32x128xbf16>, vector<256x128xf32> -> vector<256x128xf32>
    %76 = vector.broadcast %7 : vector<1x128xf32> to vector<256x128xf32>
    %77 = arith.addf %75, %76 : vector<256x128xf32>
    %cst_32 = arith.constant 5.000000e-01 : f32
    %78 = vector.broadcast %cst_32 : f32 to vector<256x128xf32>
    %79 = arith.mulf %78, %77 : vector<256x128xf32>
    %cst_33 = arith.constant 2.000000e+00 : f32
    %80 = math.sqrt %cst_33 : f32
    %cst_34 = arith.constant 1.000000e+00 : f32
    %81 = arith.divf %cst_34, %80 : f32
    %82 = vector.broadcast %81 : f32 to vector<256x128xf32>
    %83 = arith.mulf %77, %82 : vector<256x128xf32>
    %84 = math.erf %83 : vector<256x128xf32>
    %cst_35 = arith.constant 1.000000e+00 : f32
    %85 = vector.broadcast %cst_35 : f32 to vector<256x128xf32>
    %86 = arith.addf %85, %84 : vector<256x128xf32>
    %87 = arith.mulf %79, %86 : vector<256x128xf32>
    %88 = arith.truncf %87 : vector<256x128xf32> to vector<256x128xbf16>
    %cst_36 = arith.constant dense<0.000000e+00> : vector<256x32xf32>
    %89 = tpu.matmul %88, %9, %cst_36 {dimension_numbers = #tpu.dot_dimension_numbers<[1], [1], [0], [0], [0, 0, 1, 0], [], []>} : vector<256x128xbf16>, vector<32x128xbf16>, vector<256x32xf32> -> vector<256x32xf32>
    %90 = vector.broadcast %6 : vector<1x32xf32> to vector<256x32xf32>
    %91 = arith.addf %89, %90 : vector<256x32xf32>
    %cst_37 = arith.constant 5.000000e-01 : f32
    %92 = vector.broadcast %cst_37 : f32 to vector<256x32xf32>
    %93 = arith.mulf %92, %91 : vector<256x32xf32>
    %cst_38 = arith.constant 2.000000e+00 : f32
    %94 = math.sqrt %cst_38 : f32
    %cst_39 = arith.constant 1.000000e+00 : f32
    %95 = arith.divf %cst_39, %94 : f32
    %96 = vector.broadcast %95 : f32 to vector<256x32xf32>
    %97 = arith.mulf %91, %96 : vector<256x32xf32>
    %98 = math.erf %97 : vector<256x32xf32>
    %cst_40 = arith.constant 1.000000e+00 : f32
    %99 = vector.broadcast %cst_40 : f32 to vector<256x32xf32>
    %100 = arith.addf %99, %98 : vector<256x32xf32>
    %101 = arith.mulf %93, %100 : vector<256x32xf32>
    %102 = arith.addf %0, %101 : vector<256x32xf32>
    %c0_41 = arith.constant 0 : index
    %c0_42 = arith.constant 0 : index
    %103 = vector.load %arg4[%c0_41, %c0_42] : memref<256x32xf32, #tpu.memory_space<vmem>>, vector<256x32xf32>
    tpu.vector_store %arg4[%c0_41, %c0_42], %102 {strides = array<i32>} : memref<256x32xf32, #tpu.memory_space<vmem>>, vector<256x32xf32>,
    return
  }
}

</mosaic_0001>

<llo_original>
// kernel: graph_component_forward.1
$region0: #{graph_component_forward.1}
  #allocation0 [shape = 'u32[]', space=smem, size = 0x4, offset = 0x4, fixed_abs, tag = 'smem constant byte address 0x4 - core index']
  #allocation1 [shape = 'u32[144,128]{1,0:T(1,128)}', space=vmem, size = 0x12000, scoped, tag = 'internal scratch']
  %s0 = inlined_call_operand.vmem [shape: f32[256,32], index: 0, kind: input, shape index: {}]
  %s1 = inlined_call_operand.vmem [shape: f32[4,64,64], index: 1, kind: input, shape index: {}]
  %s2 = inlined_call_operand.vmem [shape: f32[8,128], index: 2, kind: input, shape index: {}]
  %s3 = inlined_call_operand.vmem [shape: bf16[32,288], index: 3, kind: input, shape index: {}]
  %s4 = inlined_call_operand.vmem [shape: f32[256,32], index: 4, kind: output, shape index: {}]
  %s5 = sld [smem:[#allocation0]]
  $region26: #{graph_component_forward.1} parent=0
    _
  %s7 = ssub.s32 1, %s5
  %s8 = scalar_select 0, %s7, %s5
  // Predicated region
  $region2: #{graph_component_forward.1} parent=0 // pred_check
    _
  $region3: #{graph_component_forward.1} parent=0 // pred_check_branch
    %10 = sbr.rel (0) target = $region5
  $region4: #{graph_component_forward.1} parent=0 // pred_region
    _
  $region5: #{graph_component_forward.1} parent=0 // pred_fallthru
    _
  // Predicated region
  $region6: #{graph_component_forward.1} parent=0 // pred_check
    _
  $region7: #{graph_component_forward.1} parent=0 // pred_check_branch
    %12 = sbr.rel (0) target = $region9
  $region8: #{graph_component_forward.1} parent=0 // pred_region
    _
  $region9: #{graph_component_forward.1} parent=0 // pred_fallthru
    _
  // Predicated region
  $region10: #{graph_component_forward.1} parent=0 // pred_check
    _
  $region11: #{graph_component_forward.1} parent=0 // pred_check_branch
    %14 = sbr.rel (0) target = $region13
  $region12: #{graph_component_forward.1} parent=0 // pred_region
    _
  $region13: #{graph_component_forward.1} parent=0 // pred_fallthru
    _
  // Predicated region
  $region14: #{graph_component_forward.1} parent=0 // pred_check
    _
  $region15: #{graph_component_forward.1} parent=0 // pred_check_branch
    %16 = sbr.rel (0) target = $region17
  $region16: #{graph_component_forward.1} parent=0 // pred_region
    _
  $region17: #{graph_component_forward.1} parent=0 // pred_fallthru
    _
  %v18 = vld [vmem:[%s0] sm:$0xff]
  %v19 = vld [vmem:[%s0 + $0x8] sm:$0xff]
  %v20 = vld [vmem:[%s0 + $0x10] sm:$0xff]
  %v21 = vld [vmem:[%s0 + $0x18] sm:$0xff]
  %v22 = vld [vmem:[%s0 + $0x20] sm:$0xff]
  %v23 = vld [vmem:[%s0 + $0x28] sm:$0xff]
  %v24 = vld [vmem:[%s0 + $0x30] sm:$0xff]
  %v25 = vld [vmem:[%s0 + $0x38] sm:$0xff]
  %v26 = vld [vmem:[%s0 + $0x40] sm:$0xff]
  %v27 = vld [vmem:[%s0 + $0x48] sm:$0xff]
  %v28 = vld [vmem:[%s0 + $0x50] sm:$0xff]
  %v29 = vld [vmem:[%s0 + $0x58] sm:$0xff]
  %v30 = vld [vmem:[%s0 + $0x60] sm:$0xff]
  %v31 = vld [vmem:[%s0 + $0x68] sm:$0xff]
  %v32 = vld [vmem:[%s0 + $0x70] sm:$0xff]
  %v33 = vld [vmem:[%s0 + $0x78] sm:$0xff]
  %v34 = vld [vmem:[%s0 + $0x80] sm:$0xff]
  %v35 = vld [vmem:[%s0 + $0x88] sm:$0xff]
  %v36 = vld [vmem:[%s0 + $0x90] sm:$0xff]
  %v37 = vld [vmem:[%s0 + $0x98] sm:$0xff]
  %v38 = vld [vmem:[%s0 + $0xa0] sm:$0xff]
  %v39 = vld [vmem:[%s0 + $0xa8] sm:$0xff]
  %v40 = vld [vmem:[%s0 + $0xb0] sm:$0xff]
  %v41 = vld [vmem:[%s0 + $0xb8] sm:$0xff]
  %v42 = vld [vmem:[%s0 + $0xc0] sm:$0xff]
  %v43 = vld [vmem:[%s0 + $0xc8] sm:$0xff]
  %v44 = vld [vmem:[%s0 + $0xd0] sm:$0xff]
  %v45 = vld [vmem:[%s0 + $0xd8] sm:$0xff]
  %v46 = vld [vmem:[%s0 + $0xe0] sm:$0xff]
  %v47 = vld [vmem:[%s0 + $0xe8] sm:$0xff]
  %v48 = vld [vmem:[%s0 + $0xf0] sm:$0xff]
  %v49 = vld [vmem:[%s0 + $0xf8] sm:$0xff]
  %v50 = vld [vmem:[%s2] sm:$0x1]
  %v51 = vld [vmem:[%s2 + $0x1] sm:$0x1]
  %v52 = vld [vmem:[%s2 + $0x2] sm:$0x1]
  %v53 = vld [vmem:[%s2 + $0x3] sm:$0x1]
  %v54 = vld [vmem:[%s2 + $0x4] sm:$0x1]
  %v55 = vld [vmem:[%s2 + $0x5] sm:$0x1]
  %v56 = vld [vmem:[%s2 + $0x6] sm:$0x1]
  %v57 = vld [vmem:[%s3] sm:$0xf]
  %v58 = vld [vmem:[%s3 + $0xc] sm:$0xf]
  %v59 = vld [vmem:[%s3 + $0x18] sm:$0xf]
  %v60 = vld [vmem:[%s3 + $0x24] sm:$0xf]
  %v61 = vld [vmem:[%s3 + $0x4] sm:$0xf]
  %v62 = vld [vmem:[%s3 + $0x10] sm:$0xf]
  %v63 = vld [vmem:[%s3 + $0x1c] sm:$0xf]
  %v64 = vld [vmem:[%s3 + $0x28] sm:$0xf]
  %v65 = vld [vmem:[%s3 + $0x8] sm:$0xf]
  %v66 = vld [vmem:[%s3 + $0x14] sm:$0xf]
  %v67 = vld [vmem:[%s3 + $0x20] sm:$0xf]
  %v68 = vld [vmem:[%s3 + $0x2c] sm:$0xf]
  %vm69 = vcmask 261120
  %v70 = vsel %vm69, %v18, 0.0
  %71 = vadd.xlane.f32.xlu0 %v70
  %v72 = vpop.xlane.xlu0 %71
  %v73 = vsel %vm69, %v19, 0.0
  %74 = vadd.xlane.f32.xlu0 %v73
  %v75 = vpop.xlane.xlu0 %74
  %v76 = vsel %vm69, %v20, 0.0
  %77 = vadd.xlane.f32.xlu0 %v76
  %v78 = vpop.xlane.xlu0 %77
  %v79 = vsel %vm69, %v21, 0.0
  %80 = vadd.xlane.f32.xlu0 %v79
  %v81 = vpop.xlane.xlu0 %80
  %v82 = vsel %vm69, %v22, 0.0
  %83 = vadd.xlane.f32.xlu0 %v82
  %v84 = vpop.xlane.xlu0 %83
  %v85 = vsel %vm69, %v23, 0.0
  %86 = vadd.xlane.f32.xlu0 %v85
  %v87 = vpop.xlane.xlu0 %86
  %v88 = vsel %vm69, %v24, 0.0
  %89 = vadd.xlane.f32.xlu0 %v88
  %v90 = vpop.xlane.xlu0 %89
  %v91 = vsel %vm69, %v25, 0.0
  %92 = vadd.xlane.f32.xlu0 %v91
  %v93 = vpop.xlane.xlu0 %92
  %v94 = vsel %vm69, %v26, 0.0
  %95 = vadd.xlane.f32.xlu0 %v94
  %v96 = vpop.xlane.xlu0 %95
  %v97 = vsel %vm69, %v27, 0.0
  %98 = vadd.xlane.f32.xlu0 %v97
  %v99 = vpop.xlane.xlu0 %98
  %v100 = vsel %vm69, %v28, 0.0
  %101 = vadd.xlane.f32.xlu0 %v100
  %v102 = vpop.xlane.xlu0 %101
  %v103 = vsel %vm69, %v29, 0.0
  %104 = vadd.xlane.f32.xlu0 %v103
  %v105 = vpop.xlane.xlu0 %104
  %v106 = vsel %vm69, %v30, 0.0
  %107 = vadd.xlane.f32.xlu0 %v106
  %v108 = vpop.xlane.xlu0 %107
  %v109 = vsel %vm69, %v31, 0.0
  %110 = vadd.xlane.f32.xlu0 %v109
  %v111 = vpop.xlane.xlu0 %110
  %v112 = vsel %vm69, %v32, 0.0
  %113 = vadd.xlane.f32.xlu0 %v112
  %v114 = vpop.xlane.xlu0 %113
  %v115 = vsel %vm69, %v33, 0.0
  %116 = vadd.xlane.f32.xlu0 %v115
  %v117 = vpop.xlane.xlu0 %116
  %v118 = vsel %vm69, %v34, 0.0
  %119 = vadd.xlane.f32.xlu0 %v118
  %v120 = vpop.xlane.xlu0 %119
  %v121 = vsel %vm69, %v35, 0.0
  %122 = vadd.xlane.f32.xlu0 %v121
  %v123 = vpop.xlane.xlu0 %122
  %v124 = vsel %vm69, %v36, 0.0
  %125 = vadd.xlane.f32.xlu0 %v124
  %v126 = vpop.xlane.xlu0 %125
  %v127 = vsel %vm69, %v37, 0.0
  %128 = vadd.xlane.f32.xlu0 %v127
  %v129 = vpop.xlane.xlu0 %128
  %v130 = vsel %vm69, %v38, 0.0
  %131 = vadd.xlane.f32.xlu0 %v130
  %v132 = vpop.xlane.xlu0 %131
  %v133 = vsel %vm69, %v39, 0.0
  %134 = vadd.xlane.f32.xlu0 %v133
  %v135 = vpop.xlane.xlu0 %134
  %v136 = vsel %vm69, %v40, 0.0
  %137 = vadd.xlane.f32.xlu0 %v136
  %v138 = vpop.xlane.xlu0 %137
  %v139 = vsel %vm69, %v41, 0.0
  %140 = vadd.xlane.f32.xlu0 %v139
  %v141 = vpop.xlane.xlu0 %140
  %v142 = vsel %vm69, %v42, 0.0
  %143 = vadd.xlane.f32.xlu0 %v142
  %v144 = vpop.xlane.xlu0 %143
  %v145 = vsel %vm69, %v43, 0.0
  %146 = vadd.xlane.f32.xlu0 %v145
  %v147 = vpop.xlane.xlu0 %146
  %v148 = vsel %vm69, %v44, 0.0
  %149 = vadd.xlane.f32.xlu0 %v148
  %v150 = vpop.xlane.xlu0 %149
  %v151 = vsel %vm69, %v45, 0.0
  %152 = vadd.xlane.f32.xlu0 %v151
  %v153 = vpop.xlane.xlu0 %152
  %v154 = vsel %vm69, %v46, 0.0
  %155 = vadd.xlane.f32.xlu0 %v154
  %v156 = vpop.xlane.xlu0 %155
  %v157 = vsel %vm69, %v47, 0.0
  %158 = vadd.xlane.f32.xlu0 %v157
  %v159 = vpop.xlane.xlu0 %158
  %v160 = vsel %vm69, %v48, 0.0
  %161 = vadd.xlane.f32.xlu0 %v160
  %v162 = vpop.xlane.xlu0 %161
  %v163 = vsel %vm69, %v49, 0.0
  %164 = vadd.xlane.f32.xlu0 %v163
  %v165 = vpop.xlane.xlu0 %164
  %v166 = vrcp.pop 32.0
  %v167 = vmul.f32 %v72, %v166
  %v168 = vmul.f32 %v75, %v166
  %v169 = vmul.f32 %v78, %v166
  %v170 = vmul.f32 %v81, %v166
  %v171 = vmul.f32 %v84, %v166
  %v172 = vmul.f32 %v87, %v166
  %v173 = vmul.f32 %v90, %v166
  %v174 = vmul.f32 %v93, %v166
  %v175 = vmul.f32 %v96, %v166
  %v176 = vmul.f32 %v99, %v166
  %v177 = vmul.f32 %v102, %v166
  %v178 = vmul.f32 %v105, %v166
  %v179 = vmul.f32 %v108, %v166
  %v180 = vmul.f32 %v111, %v166
  %v181 = vmul.f32 %v114, %v166
  %v182 = vmul.f32 %v117, %v166
  %v183 = vmul.f32 %v120, %v166
  %v184 = vmul.f32 %v123, %v166
  %v185 = vmul.f32 %v126, %v166
  %v186 = vmul.f32 %v129, %v166
  %v187 = vmul.f32 %v132, %v166
  %v188 = vmul.f32 %v135, %v166
  %v189 = vmul.f32 %v138, %v166
  %v190 = vmul.f32 %v141, %v166
  %v191 = vmul.f32 %v144, %v166
  %v192 = vmul.f32 %v147, %v166
  %v193 = vmul.f32 %v150, %v166
  %v194 = vmul.f32 %v153, %v166
  %v195 = vmul.f32 %v156, %v166
  %v196 = vmul.f32 %v159, %v166
  %v197 = vmul.f32 %v162, %v166
  %v198 = vmul.f32 %v165, %v166
  %v199 = vsub.f32 %v18, %v167
  %v200 = vsub.f32 %v19, %v168
  %v201 = vsub.f32 %v20, %v169
  %v202 = vsub.f32 %v21, %v170
  %v203 = vsub.f32 %v22, %v171
  %v204 = vsub.f32 %v23, %v172
  %v205 = vsub.f32 %v24, %v173
  %v206 = vsub.f32 %v25, %v174
  %v207 = vsub.f32 %v26, %v175
  %v208 = vsub.f32 %v27, %v176
  %v209 = vsub.f32 %v28, %v177
  %v210 = vsub.f32 %v29, %v178
  %v211 = vsub.f32 %v30, %v179
  %v212 = vsub.f32 %v31, %v180
  %v213 = vsub.f32 %v32, %v181
  %v214 = vsub.f32 %v33, %v182
  %v215 = vsub.f32 %v34, %v183
  %v216 = vsub.f32 %v35, %v184
  %v217 = vsub.f32 %v36, %v185
  %v218 = vsub.f32 %v37, %v186
  %v219 = vsub.f32 %v38, %v187
  %v220 = vsub.f32 %v39, %v188
  %v221 = vsub.f32 %v40, %v189
  %v222 = vsub.f32 %v41, %v190
  %v223 = vsub.f32 %v42, %v191
  %v224 = vsub.f32 %v43, %v192
  %v225 = vsub.f32 %v44, %v193
  %v226 = vsub.f32 %v45, %v194
  %v227 = vsub.f32 %v46, %v195
  %v228 = vsub.f32 %v47, %v196
  %v229 = vsub.f32 %v48, %v197
  %v230 = vsub.f32 %v49, %v198
  %v231 = vmul.f32 %v199, %v199
  %v232 = vmul.f32 %v200, %v200
  %v233 = vmul.f32 %v201, %v201
  %v234 = vmul.f32 %v202, %v202
  %v235 = vmul.f32 %v203, %v203
  %v236 = vmul.f32 %v204, %v204
  %v237 = vmul.f32 %v205, %v205
  %v238 = vmul.f32 %v206, %v206
  %v239 = vmul.f32 %v207, %v207
  %v240 = vmul.f32 %v208, %v208
  %v241 = vmul.f32 %v209, %v209
  %v242 = vmul.f32 %v210, %v210
  %v243 = vmul.f32 %v211, %v211
  %v244 = vmul.f32 %v212, %v212
  %v245 = vmul.f32 %v213, %v213
  %v246 = vmul.f32 %v214, %v214
  %v247 = vmul.f32 %v215, %v215
  %v248 = vmul.f32 %v216, %v216
  %v249 = vmul.f32 %v217, %v217
  %v250 = vmul.f32 %v218, %v218
  %v251 = vmul.f32 %v219, %v219
  %v252 = vmul.f32 %v220, %v220
  %v253 = vmul.f32 %v221, %v221
  %v254 = vmul.f32 %v222, %v222
  %v255 = vmul.f32 %v223, %v223
  %v256 = vmul.f32 %v224, %v224
  %v257 = vmul.f32 %v225, %v225
  %v258 = vmul.f32 %v226, %v226
  %v259 = vmul.f32 %v227, %v227
  %v260 = vmul.f32 %v228, %v228
  %v261 = vmul.f32 %v229, %v229
  %v262 = vmul.f32 %v230, %v230
  %v263 = vsel %vm69, %v231, 0.0
  %264 = vadd.xlane.f32.xlu0 %v263
  %v265 = vpop.xlane.xlu0 %264
  %v266 = vsel %vm69, %v232, 0.0
  %267 = vadd.xlane.f32.xlu0 %v266
  %v268 = vpop.xlane.xlu0 %267
  %v269 = vsel %vm69, %v233, 0.0
  %270 = vadd.xlane.f32.xlu0 %v269
  %v271 = vpop.xlane.xlu0 %270
  %v272 = vsel %vm69, %v234, 0.0
  %273 = vadd.xlane.f32.xlu0 %v272
  %v274 = vpop.xlane.xlu0 %273
  %v275 = vsel %vm69, %v235, 0.0
  %276 = vadd.xlane.f32.xlu0 %v275
  %v277 = vpop.xlane.xlu0 %276
  %v278 = vsel %vm69, %v236, 0.0
  %279 = vadd.xlane.f32.xlu0 %v278
  %v280 = vpop.xlane.xlu0 %279
  %v281 = vsel %vm69, %v237, 0.0
  %282 = vadd.xlane.f32.xlu0 %v281
  %v283 = vpop.xlane.xlu0 %282
  %v284 = vsel %vm69, %v238, 0.0
  %285 = vadd.xlane.f32.xlu0 %v284
  %v286 = vpop.xlane.xlu0 %285
  %v287 = vsel %vm69, %v239, 0.0
  %288 = vadd.xlane.f32.xlu0 %v287
  %v289 = vpop.xlane.xlu0 %288
  %v290 = vsel %vm69, %v240, 0.0
  %291 = vadd.xlane.f32.xlu0 %v290
  %v292 = vpop.xlane.xlu0 %291
  %v293 = vsel %vm69, %v241, 0.0
  %294 = vadd.xlane.f32.xlu0 %v293
  %v295 = vpop.xlane.xlu0 %294
  %v296 = vsel %vm69, %v242, 0.0
  %297 = vadd.xlane.f32.xlu0 %v296
  %v298 = vpop.xlane.xlu0 %297
  %v299 = vsel %vm69, %v243, 0.0
  %300 = vadd.xlane.f32.xlu0 %v299
  %v301 = vpop.xlane.xlu0 %300
  %v302 = vsel %vm69, %v244, 0.0
  %303 = vadd.xlane.f32.xlu0 %v302
  %v304 = vpop.xlane.xlu0 %303
  %v305 = vsel %vm69, %v245, 0.0
  %306 = vadd.xlane.f32.xlu0 %v305
  %v307 = vpop.xlane.xlu0 %306
  %v308 = vsel %vm69, %v246, 0.0
  %309 = vadd.xlane.f32.xlu0 %v308
  %v310 = vpop.xlane.xlu0 %309
  %v311 = vsel %vm69, %v247, 0.0
  %312 = vadd.xlane.f32.xlu0 %v311
  %v313 = vpop.xlane.xlu0 %312
  %v314 = vsel %vm69, %v248, 0.0
  %315 = vadd.xlane.f32.xlu0 %v314
  %v316 = vpop.xlane.xlu0 %315
  %v317 = vsel %vm69, %v249, 0.0
  %318 = vadd.xlane.f32.xlu0 %v317
  %v319 = vpop.xlane.xlu0 %318
  %v320 = vsel %vm69, %v250, 0.0
  %321 = vadd.xlane.f32.xlu0 %v320
  %v322 = vpop.xlane.xlu0 %321
  %v323 = vsel %vm69, %v251, 0.0
  %324 = vadd.xlane.f32.xlu0 %v323
  %v325 = vpop.xlane.xlu0 %324
  %v326 = vsel %vm69, %v252, 0.0
  %327 = vadd.xlane.f32.xlu0 %v326
  %v328 = vpop.xlane.xlu0 %327
  %v329 = vsel %vm69, %v253, 0.0
  %330 = vadd.xlane.f32.xlu0 %v329
  %v331 = vpop.xlane.xlu0 %330
  %v332 = vsel %vm69, %v254, 0.0
  %333 = vadd.xlane.f32.xlu0 %v332
  %v334 = vpop.xlane.xlu0 %333
  %v335 = vsel %vm69, %v255, 0.0
  %336 = vadd.xlane.f32.xlu0 %v335
  %v337 = vpop.xlane.xlu0 %336
  %v338 = vsel %vm69, %v256, 0.0
  %339 = vadd.xlane.f32.xlu0 %v338
  %v340 = vpop.xlane.xlu0 %339
  %v341 = vsel %vm69, %v257, 0.0
  %342 = vadd.xlane.f32.xlu0 %v341
  %v343 = vpop.xlane.xlu0 %342
  %v344 = vsel %vm69, %v258, 0.0
  %345 = vadd.xlane.f32.xlu0 %v344
  %v346 = vpop.xlane.xlu0 %345
  %v347 = vsel %vm69, %v259, 0.0
  %348 = vadd.xlane.f32.xlu0 %v347
  %v349 = vpop.xlane.xlu0 %348
  %v350 = vsel %vm69, %v260, 0.0
  %351 = vadd.xlane.f32.xlu0 %v350
  %v352 = vpop.xlane.xlu0 %351
  %v353 = vsel %vm69, %v261, 0.0
  %354 = vadd.xlane.f32.xlu0 %v353
  %v355 = vpop.xlane.xlu0 %354
  %v356 = vsel %vm69, %v262, 0.0
  %357 = vadd.xlane.f32.xlu0 %v356
  %v358 = vpop.xlane.xlu0 %357
  %v359 = vmul.f32 %v265, %v166
  %v360 = vmul.f32 %v268, %v166
  %v361 = vmul.f32 %v271, %v166
  %v362 = vmul.f32 %v274, %v166
  %v363 = vmul.f32 %v277, %v166
  %v364 = vmul.f32 %v280, %v166
  %v365 = vmul.f32 %v283, %v166
  %v366 = vmul.f32 %v286, %v166
  %v367 = vmul.f32 %v289, %v166
  %v368 = vmul.f32 %v292, %v166
  %v369 = vmul.f32 %v295, %v166
  %v370 = vmul.f32 %v298, %v166
  %v371 = vmul.f32 %v301, %v166
  %v372 = vmul.f32 %v304, %v166
  %v373 = vmul.f32 %v307, %v166
  %v374 = vmul.f32 %v310, %v166
  %v375 = vmul.f32 %v313, %v166
  %v376 = vmul.f32 %v316, %v166
  %v377 = vmul.f32 %v319, %v166
  %v378 = vmul.f32 %v322, %v166
  %v379 = vmul.f32 %v325, %v166
  %v380 = vmul.f32 %v328, %v166
  %v381 = vmul.f32 %v331, %v166
  %v382 = vmul.f32 %v334, %v166
  %v383 = vmul.f32 %v337, %v166
  %v384 = vmul.f32 %v340, %v166
  %v385 = vmul.f32 %v343, %v166
  %v386 = vmul.f32 %v346, %v166
  %v387 = vmul.f32 %v349, %v166
  %v388 = vmul.f32 %v352, %v166
  %v389 = vmul.f32 %v355, %v166
  %v390 = vmul.f32 %v358, %v166
  %v391 = vadd.f32 %v359, 1e-05
  %v392 = vadd.f32 %v360, 1e-05
  %v393 = vadd.f32 %v361, 1e-05
  %v394 = vadd.f32 %v362, 1e-05
  %v395 = vadd.f32 %v363, 1e-05
  %v396 = vadd.f32 %v364, 1e-05
  %v397 = vadd.f32 %v365, 1e-05
  %v398 = vadd.f32 %v366, 1e-05
  %v399 = vadd.f32 %v367, 1e-05
  %v400 = vadd.f32 %v368, 1e-05
  %v401 = vadd.f32 %v369, 1e-05
  %v402 = vadd.f32 %v370, 1e-05
  %v403 = vadd.f32 %v371, 1e-05
  %v404 = vadd.f32 %v372, 1e-05
  %v405 = vadd.f32 %v373, 1e-05
  %v406 = vadd.f32 %v374, 1e-05
  %v407 = vadd.f32 %v375, 1e-05
  %v408 = vadd.f32 %v376, 1e-05
  %v409 = vadd.f32 %v377, 1e-05
  %v410 = vadd.f32 %v378, 1e-05
  %v411 = vadd.f32 %v379, 1e-05
  %v412 = vadd.f32 %v380, 1e-05
  %v413 = vadd.f32 %v381, 1e-05
  %v414 = vadd.f32 %v382, 1e-05
  %v415 = vadd.f32 %v383, 1e-05
  %v416 = vadd.f32 %v384, 1e-05
  %v417 = vadd.f32 %v385, 1e-05
  %v418 = vadd.f32 %v386, 1e-05
  %v419 = vadd.f32 %v387, 1e-05
  %v420 = vadd.f32 %v388, 1e-05
  %v421 = vadd.f32 %v389, 1e-05
  %v422 = vadd.f32 %v390, 1e-05
  %v423 = vrsqrt.pop %v391
  %v424 = vrsqrt.pop %v392
  %v425 = vrsqrt.pop %v393
  %v426 = vrsqrt.pop %v394
  %v427 = vrsqrt.pop %v395
  %v428 = vrsqrt.pop %v396
  %v429 = vrsqrt.pop %v397
  %v430 = vrsqrt.pop %v398
  %v431 = vrsqrt.pop %v399
  %v432 = vrsqrt.pop %v400
  %v433 = vrsqrt.pop %v401
  %v434 = vrsqrt.pop %v402
  %v435 = vrsqrt.pop %v403
  %v436 = vrsqrt.pop %v404
  %v437 = vrsqrt.pop %v405
  %v438 = vrsqrt.pop %v406
  %v439 = vrsqrt.pop %v407
  %v440 = vrsqrt.pop %v408
  %v441 = vrsqrt.pop %v409
  %v442 = vrsqrt.pop %v410
  %v443 = vrsqrt.pop %v411
  %v444 = vrsqrt.pop %v412
  %v445 = vrsqrt.pop %v413
  %v446 = vrsqrt.pop %v414
  %v447 = vrsqrt.pop %v415
  %v448 = vrsqrt.pop %v416
  %v449 = vrsqrt.pop %v417
  %v450 = vrsqrt.pop %v418
  %v451 = vrsqrt.pop %v419
  %v452 = vrsqrt.pop %v420
  %v453 = vrsqrt.pop %v421
  %v454 = vrsqrt.pop %v422
  %v455 = vmul.f32 %v199, %v423
  %v456 = vmul.f32 %v200, %v424
  %v457 = vmul.f32 %v201, %v425
  %v458 = vmul.f32 %v202, %v426
  %v459 = vmul.f32 %v203, %v427
  %v460 = vmul.f32 %v204, %v428
  %v461 = vmul.f32 %v205, %v429
  %v462 = vmul.f32 %v206, %v430
  %v463 = vmul.f32 %v207, %v431
  %v464 = vmul.f32 %v208, %v432
  %v465 = vmul.f32 %v209, %v433
  %v466 = vmul.f32 %v210, %v434
  %v467 = vmul.f32 %v211, %v435
  %v468 = vmul.f32 %v212, %v436
  %v469 = vmul.f32 %v213, %v437
  %v470 = vmul.f32 %v214, %v438
  %v471 = vmul.f32 %v215, %v439
  %v472 = vmul.f32 %v216, %v440
  %v473 = vmul.f32 %v217, %v441
  %v474 = vmul.f32 %v218, %v442
  %v475 = vmul.f32 %v219, %v443
  %v476 = vmul.f32 %v220, %v444
  %v477 = vmul.f32 %v221, %v445
  %v478 = vmul.f32 %v222, %v446
  %v479 = vmul.f32 %v223, %v447
  %v480 = vmul.f32 %v224, %v448
  %v481 = vmul.f32 %v225, %v449
  %v482 = vmul.f32 %v226, %v450
  %v483 = vmul.f32 %v227, %v451
  %v484 = vmul.f32 %v228, %v452
  %v485 = vmul.f32 %v229, %v453
  %v486 = vmul.f32 %v230, %v454
  %v487 = vlaneseq
  %v488 = vshrl.u32 %v487, 7
  %v489 = vsub.s32 0, %v488
  %v490 = vrot.slane %v50, %v489
  %v491 = vmul.f32 %v455, %v490
  %v492 = vmul.f32 %v456, %v490
  %v493 = vmul.f32 %v457, %v490
  %v494 = vmul.f32 %v458, %v490
  %v495 = vmul.f32 %v459, %v490
  %v496 = vmul.f32 %v460, %v490
  %v497 = vmul.f32 %v461, %v490
  %v498 = vmul.f32 %v462, %v490
  %v499 = vmul.f32 %v463, %v490
  %v500 = vmul.f32 %v464, %v490
  %v501 = vmul.f32 %v465, %v490
  %v502 = vmul.f32 %v466, %v490
  %v503 = vmul.f32 %v467, %v490
  %v504 = vmul.f32 %v468, %v490
  %v505 = vmul.f32 %v469, %v490
  %v506 = vmul.f32 %v470, %v490
  %v507 = vmul.f32 %v471, %v490
  %v508 = vmul.f32 %v472, %v490
  %v509 = vmul.f32 %v473, %v490
  %v510 = vmul.f32 %v474, %v490
  %v511 = vmul.f32 %v475, %v490
  %v512 = vmul.f32 %v476, %v490
  %v513 = vmul.f32 %v477, %v490
  %v514 = vmul.f32 %v478, %v490
  %v515 = vmul.f32 %v479, %v490
  %v516 = vmul.f32 %v480, %v490
  %v517 = vmul.f32 %v481, %v490
  %v518 = vmul.f32 %v482, %v490
  %v519 = vmul.f32 %v483, %v490
  %v520 = vmul.f32 %v484, %v490
  %v521 = vmul.f32 %v485, %v490
  %v522 = vmul.f32 %v486, %v490
  %v523 = vlaneseq
  %v524 = vshrl.u32 %v523, 7
  %v525 = vsub.s32 0, %v524
  %v526 = vrot.slane %v51, %v525
  %v527 = vadd.f32 %v491, %v526
  %v528 = vadd.f32 %v492, %v526
  %v529 = vadd.f32 %v493, %v526
  %v530 = vadd.f32 %v494, %v526
  %v531 = vadd.f32 %v495, %v526
  %v532 = vadd.f32 %v496, %v526
  %v533 = vadd.f32 %v497, %v526
  %v534 = vadd.f32 %v498, %v526
  %v535 = vadd.f32 %v499, %v526
  %v536 = vadd.f32 %v500, %v526
  %v537 = vadd.f32 %v501, %v526
  %v538 = vadd.f32 %v502, %v526
  %v539 = vadd.f32 %v503, %v526
  %v540 = vadd.f32 %v504, %v526
  %v541 = vadd.f32 %v505, %v526
  %v542 = vadd.f32 %v506, %v526
  %v543 = vadd.f32 %v507, %v526
  %v544 = vadd.f32 %v508, %v526
  %v545 = vadd.f32 %v509, %v526
  %v546 = vadd.f32 %v510, %v526
  %v547 = vadd.f32 %v511, %v526
  %v548 = vadd.f32 %v512, %v526
  %v549 = vadd.f32 %v513, %v526
  %v550 = vadd.f32 %v514, %v526
  %v551 = vadd.f32 %v515, %v526
  %v552 = vadd.f32 %v516, %v526
  %v553 = vadd.f32 %v517, %v526
  %v554 = vadd.f32 %v518, %v526
  %v555 = vadd.f32 %v519, %v526
  %v556 = vadd.f32 %v520, %v526
  %v557 = vadd.f32 %v521, %v526
  %v558 = vadd.f32 %v522, %v526
  %v559 = vmul.f32 %v527, 0.5
  %v560 = vmul.f32 %v528, 0.5
  %v561 = vmul.f32 %v529, 0.5
  %v562 = vmul.f32 %v530, 0.5
  %v563 = vmul.f32 %v531, 0.5
  %v564 = vmul.f32 %v532, 0.5
  %v565 = vmul.f32 %v533, 0.5
  %v566 = vmul.f32 %v534, 0.5
  %v567 = vmul.f32 %v535, 0.5
  %v568 = vmul.f32 %v536, 0.5
  %v569 = vmul.f32 %v537, 0.5
  %v570 = vmul.f32 %v538, 0.5
  %v571 = vmul.f32 %v539, 0.5
  %v572 = vmul.f32 %v540, 0.5
  %v573 = vmul.f32 %v541, 0.5
  %v574 = vmul.f32 %v542, 0.5
  %v575 = vmul.f32 %v543, 0.5
  %v576 = vmul.f32 %v544, 0.5
  %v577 = vmul.f32 %v545, 0.5
  %v578 = vmul.f32 %v546, 0.5
  %v579 = vmul.f32 %v547, 0.5
  %v580 = vmul.f32 %v548, 0.5
  %v581 = vmul.f32 %v549, 0.5
  %v582 = vmul.f32 %v550, 0.5
  %v583 = vmul.f32 %v551, 0.5
  %v584 = vmul.f32 %v552, 0.5
  %v585 = vmul.f32 %v553, 0.5
  %v586 = vmul.f32 %v554, 0.5
  %v587 = vmul.f32 %v555, 0.5
  %v588 = vmul.f32 %v556, 0.5
  %v589 = vmul.f32 %v557, 0.5
  %v590 = vmul.f32 %v558, 0.5
  %v591 = vmul.f32 %v527, 0.70710677
  %v592 = vmul.f32 %v528, 0.70710677
  %v593 = vmul.f32 %v529, 0.70710677
  %v594 = vmul.f32 %v530, 0.70710677
  %v595 = vmul.f32 %v531, 0.70710677
  %v596 = vmul.f32 %v532, 0.70710677
  %v597 = vmul.f32 %v533, 0.70710677
  %v598 = vmul.f32 %v534, 0.70710677
  %v599 = vmul.f32 %v535, 0.70710677
  %v600 = vmul.f32 %v536, 0.70710677
  %v601 = vmul.f32 %v537, 0.70710677
  %v602 = vmul.f32 %v538, 0.70710677
  %v603 = vmul.f32 %v539, 0.70710677
  %v604 = vmul.f32 %v540, 0.70710677
  %v605 = vmul.f32 %v541, 0.70710677
  %v606 = vmul.f32 %v542, 0.70710677
  %v607 = vmul.f32 %v543, 0.70710677
  %v608 = vmul.f32 %v544, 0.70710677
  %v609 = vmul.f32 %v545, 0.70710677
  %v610 = vmul.f32 %v546, 0.70710677
  %v611 = vmul.f32 %v547, 0.70710677
  %v612 = vmul.f32 %v548, 0.70710677
  %v613 = vmul.f32 %v549, 0.70710677
  %v614 = vmul.f32 %v550, 0.70710677
  %v615 = vmul.f32 %v551, 0.70710677
  %v616 = vmul.f32 %v552, 0.70710677
  %v617 = vmul.f32 %v553, 0.70710677
  %v618 = vmul.f32 %v554, 0.70710677
  %v619 = vmul.f32 %v555, 0.70710677
  %v620 = vmul.f32 %v556, 0.70710677
  %v621 = vmul.f32 %v557, 0.70710677
  %v622 = vmul.f32 %v558, 0.70710677
  %v623 = verf.f32.pop %v591
  %v624 = verf.f32.pop %v592
  %v625 = verf.f32.pop %v593
  %v626 = verf.f32.pop %v594
  %v627 = verf.f32.pop %v595
  %v628 = verf.f32.pop %v596
  %v629 = verf.f32.pop %v597
  %v630 = verf.f32.pop %v598
  %v631 = verf.f32.pop %v599
  %v632 = verf.f32.pop %v600
  %v633 = verf.f32.pop %v601
  %v634 = verf.f32.pop %v602
  %v635 = verf.f32.pop %v603
  %v636 = verf.f32.pop %v604
  %v637 = verf.f32.pop %v605
  %v638 = verf.f32.pop %v606
  %v639 = verf.f32.pop %v607
  %v640 = verf.f32.pop %v608
  %v641 = verf.f32.pop %v609
  %v642 = verf.f32.pop %v610
  %v643 = verf.f32.pop %v611
  %v644 = verf.f32.pop %v612
  %v645 = verf.f32.pop %v613
  %v646 = verf.f32.pop %v614
  %v647 = verf.f32.pop %v615
  %v648 = verf.f32.pop %v616
  %v649 = verf.f32.pop %v617
  %v650 = verf.f32.pop %v618
  %v651 = verf.f32.pop %v619
  %v652 = verf.f32.pop %v620
  %v653 = verf.f32.pop %v621
  %v654 = verf.f32.pop %v622
  %v655 = vadd.f32 %v623, 1.0
  %v656 = vadd.f32 %v624, 1.0
  %v657 = vadd.f32 %v625, 1.0
  %v658 = vadd.f32 %v626, 1.0
  %v659 = vadd.f32 %v627, 1.0
  %v660 = vadd.f32 %v628, 1.0
  %v661 = vadd.f32 %v629, 1.0
  %v662 = vadd.f32 %v630, 1.0
  %v663 = vadd.f32 %v631, 1.0
  %v664 = vadd.f32 %v632, 1.0
  %v665 = vadd.f32 %v633, 1.0
  %v666 = vadd.f32 %v634, 1.0
  %v667 = vadd.f32 %v635, 1.0
  %v668 = vadd.f32 %v636, 1.0
  %v669 = vadd.f32 %v637, 1.0
  %v670 = vadd.f32 %v638, 1.0
  %v671 = vadd.f32 %v639, 1.0
  %v672 = vadd.f32 %v640, 1.0
  %v673 = vadd.f32 %v641, 1.0
  %v674 = vadd.f32 %v642, 1.0
  %v675 = vadd.f32 %v643, 1.0
  %v676 = vadd.f32 %v644, 1.0
  %v677 = vadd.f32 %v645, 1.0
  %v678 = vadd.f32 %v646, 1.0
  %v679 = vadd.f32 %v647, 1.0
  %v680 = vadd.f32 %v648, 1.0
  %v681 = vadd.f32 %v649, 1.0
  %v682 = vadd.f32 %v650, 1.0
  %v683 = vadd.f32 %v651, 1.0
  %v684 = vadd.f32 %v652, 1.0
  %v685 = vadd.f32 %v653, 1.0
  %v686 = vadd.f32 %v654, 1.0
  %v687 = vmul.f32 %v559, %v655
  %v688 = vmul.f32 %v560, %v656
  %v689 = vmul.f32 %v561, %v657
  %v690 = vmul.f32 %v562, %v658
  %v691 = vmul.f32 %v563, %v659
  %v692 = vmul.f32 %v564, %v660
  %v693 = vmul.f32 %v565, %v661
  %v694 = vmul.f32 %v566, %v662
  %v695 = vmul.f32 %v567, %v663
  %v696 = vmul.f32 %v568, %v664
  %v697 = vmul.f32 %v569, %v665
  %v698 = vmul.f32 %v570, %v666
  %v699 = vmul.f32 %v571, %v667
  %v700 = vmul.f32 %v572, %v668
  %v701 = vmul.f32 %v573, %v669
  %v702 = vmul.f32 %v574, %v670
  %v703 = vmul.f32 %v575, %v671
  %v704 = vmul.f32 %v576, %v672
  %v705 = vmul.f32 %v577, %v673
  %v706 = vmul.f32 %v578, %v674
  %v707 = vmul.f32 %v579, %v675
  %v708 = vmul.f32 %v580, %v676
  %v709 = vmul.f32 %v581, %v677
  %v710 = vmul.f32 %v582, %v678
  %v711 = vmul.f32 %v583, %v679
  %v712 = vmul.f32 %v584, %v680
  %v713 = vmul.f32 %v585, %v681
  %v714 = vmul.f32 %v586, %v682
  %v715 = vmul.f32 %v587, %v683
  %v716 = vmul.f32 %v588, %v684
  %v717 = vmul.f32 %v589, %v685
  %v718 = vmul.f32 %v590, %v686
  %v719 = vpack.c.bf16 %v688, %v687
  %v720 = vpack.c.bf16 %v690, %v689
  %v721 = vpack.c.bf16 %v692, %v691
  %v722 = vpack.c.bf16 %v694, %v693
  %v723 = vpack.c.bf16 %v696, %v695
  %v724 = vpack.c.bf16 %v698, %v697
  %v725 = vpack.c.bf16 %v700, %v699
  %v726 = vpack.c.bf16 %v702, %v701
  %v727 = vpack.c.bf16 %v704, %v703
  %v728 = vpack.c.bf16 %v706, %v705
  %v729 = vpack.c.bf16 %v708, %v707
  %v730 = vpack.c.bf16 %v710, %v709
  %v731 = vpack.c.bf16 %v712, %v711
  %v732 = vpack.c.bf16 %v714, %v713
  %v733 = vpack.c.bf16 %v716, %v715
  %v734 = vpack.c.bf16 %v718, %v717
  %v739 = vunpack.c.l.b16 %v65
  %v740 = vunpack.c.l.b16 %v66
  %v741 = vunpack.c.l.b16 %v67
  %v742 = vunpack.c.l.b16 %v68
  %v743 = vpack.c.b16 %v740, %v739
  %v744 = vpack.c.b16 %v742, %v741
  %v748 = vsel %vm69, %v719, 0
  %v751 = vsel %vm69, %v720, 0
  %v754 = vsel %vm69, %v721, 0
  %v757 = vsel %vm69, %v722, 0
  %v760 = vsel %vm69, %v723, 0
  %v763 = vsel %vm69, %v724, 0
  %v766 = vsel %vm69, %v725, 0
  %v769 = vsel %vm69, %v726, 0
  %v772 = vsel %vm69, %v727, 0
  %v775 = vsel %vm69, %v728, 0
  %v778 = vsel %vm69, %v729, 0
  %v781 = vsel %vm69, %v730, 0
  %v784 = vsel %vm69, %v731, 0
  %v787 = vsel %vm69, %v732, 0
  %v790 = vsel %vm69, %v733, 0
  %v793 = vsel %vm69, %v734, 0
  %795 = vmatprep.subr.bf16.mxu0 0
  %796 = vmatpush1.bf16.msra.mxu0 %v743
  %797 = vmatprep.subr.bf16.mxu0 0
  %798 = vmatpush1.bf16.msra.mxu0 %v744
  %799 = vmatprep.subr.bf16.mxu0 0
  %800 = vmatpush1.bf16.msra.mxu0 0
  %801 = vmatprep.subr.bf16.mxu0 0
  %802 = vmatpush1.bf16.msra.mxu0 0
  %803 = vmatprep.subr.bf16.mxu0 0
  %804 = vmatpush1.bf16.msra.mxu0 0
  %805 = vmatprep.subr.bf16.mxu0 0
  %806 = vmatpush1.bf16.msra.mxu0 0
  %807 = vmatprep.subr.bf16.mxu0 0
  %808 = vmatpush1.bf16.msra.mxu0 0
  %809 = vmatprep.subr.bf16.mxu0 0
  %810 = vmatpush1.bf16.msra.mxu0 0
  %811 = vmatprep.subr.bf16.mxu0 0
  %812 = vmatpush1.bf16.msra.mxu0 0
  %813 = vmatprep.subr.bf16.mxu0 0
  %814 = vmatpush1.bf16.msra.mxu0 0
  %815 = vmatprep.subr.bf16.mxu0 0
  %816 = vmatpush1.bf16.msra.mxu0 0
  %817 = vmatprep.subr.bf16.mxu0 0
  %818 = vmatpush1.bf16.msra.mxu0 0
  %819 = vmatprep.subr.bf16.mxu0 0
  %820 = vmatpush1.bf16.msra.mxu0 0
  %821 = vmatprep.subr.bf16.mxu0 0
  %822 = vmatpush1.bf16.msra.mxu0 0
  %823 = vmatprep.subr.bf16.mxu0 0
  %824 = vmatpush1.bf16.msra.mxu0 0
  %825 = vmatprep.subr.bf16.mxu0 0
  %826 = vmatpush1.bf16.msra.mxu0 0
  %827 = vmatprep.mubr.bf16.mxu0 0
  %828 = vmatmul.mubr.bf16.gmra.mrb[0].mxu0 %v748
  %v829 = vpop.f32.mrb[0].mxu0
  %v830 = vadd.f32 0.0, %v829
  %v831 = vpop.f32.mrb[0].mxu0
  %v832 = vpop.f32.mrb[0].mxu0
  %v833 = vadd.f32 0.0, %v832
  %v834 = vpop.f32.mrb[0].mxu0
  %835 = vmatprep.mubr.bf16.mxu0 0
  %836 = vmatmul.mubr.bf16.gmra.mrb[0].mxu0 %v751
  %v837 = vpop.f32.mrb[0].mxu0
  %v838 = vadd.f32 0.0, %v837
  %v839 = vpop.f32.mrb[0].mxu0
  %v840 = vpop.f32.mrb[0].mxu0
  %v841 = vadd.f32 0.0, %v840
  %v842 = vpop.f32.mrb[0].mxu0
  %843 = vmatprep.mubr.bf16.mxu0 0
  %844 = vmatmul.mubr.bf16.gmra.mrb[0].mxu0 %v754
  %v845 = vpop.f32.mrb[0].mxu0
  %v846 = vadd.f32 0.0, %v845
  %v847 = vpop.f32.mrb[0].mxu0
  %v848 = vpop.f32.mrb[0].mxu0
  %v849 = vadd.f32 0.0, %v848
  %v850 = vpop.f32.mrb[0].mxu0
  %851 = vmatprep.mubr.bf16.mxu0 0
  %852 = vmatmul.mubr.bf16.gmra.mrb[0].mxu0 %v757
  %v853 = vpop.f32.mrb[0].mxu0
  %v854 = vadd.f32 0.0, %v853
  %v855 = vpop.f32.mrb[0].mxu0
  %v856 = vpop.f32.mrb[0].mxu0
  %v857 = vadd.f32 0.0, %v856
  %v858 = vpop.f32.mrb[0].mxu0
  %859 = vmatprep.mubr.bf16.mxu0 0
  %860 = vmatmul.mubr.bf16.gmra.mrb[0].mxu0 %v760
  %v861 = vpop.f32.mrb[0].mxu0
  %v862 = vadd.f32 0.0, %v861
  %v863 = vpop.f32.mrb[0].mxu0
  %v864 = vpop.f32.mrb[0].mxu0
  %v865 = vadd.f32 0.0, %v864
  %v866 = vpop.f32.mrb[0].mxu0
  %867 = vmatprep.mubr.bf16.mxu0 0
  %868 = vmatmul.mubr.bf16.gmra.mrb[0].mxu0 %v763
  %v869 = vpop.f32.mrb[0].mxu0
  %v870 = vadd.f32 0.0, %v869
  %v871 = vpop.f32.mrb[0].mxu0
  %v872 = vpop.f32.mrb[0].mxu0
  %v873 = vadd.f32 0.0, %v872
  %v874 = vpop.f32.mrb[0].mxu0
  %875 = vmatprep.mubr.bf16.mxu0 0
  %876 = vmatmul.mubr.bf16.gmra.mrb[0].mxu0 %v766
  %v877 = vpop.f32.mrb[0].mxu0
  %v878 = vadd.f32 0.0, %v877
  %v879 = vpop.f32.mrb[0].mxu0
  %v880 = vpop.f32.mrb[0].mxu0
  %v881 = vadd.f32 0.0, %v880
  %v882 = vpop.f32.mrb[0].mxu0
  %883 = vmatprep.mubr.bf16.mxu0 0
  %884 = vmatmul.mubr.bf16.gmra.mrb[0].mxu0 %v769
  %v885 = vpop.f32.mrb[0].mxu0
  %v886 = vadd.f32 0.0, %v885
  %v887 = vpop.f32.mrb[0].mxu0
  %v888 = vpop.f32.mrb[0].mxu0
  %v889 = vadd.f32 0.0, %v888
  %v890 = vpop.f32.mrb[0].mxu0
  %891 = vmatprep.mubr.bf16.mxu0 0
  %892 = vmatmul.mubr.bf16.gmra.mrb[0].mxu0 %v772
  %v893 = vpop.f32.mrb[0].mxu0
  %v894 = vadd.f32 0.0, %v893
  %v895 = vpop.f32.mrb[0].mxu0
  %v896 = vpop.f32.mrb[0].mxu0
  %v897 = vadd.f32 0.0, %v896
  %v898 = vpop.f32.mrb[0].mxu0
  %899 = vmatprep.mubr.bf16.mxu0 0
  %900 = vmatmul.mubr.bf16.gmra.mrb[0].mxu0 %v775
  %v901 = vpop.f32.mrb[0].mxu0
  %v902 = vadd.f32 0.0, %v901
  %v903 = vpop.f32.mrb[0].mxu0
  %v904 = vpop.f32.mrb[0].mxu0
  %v905 = vadd.f32 0.0, %v904
  %v906 = vpop.f32.mrb[0].mxu0
  %907 = vmatprep.mubr.bf16.mxu0 0
  %908 = vmatmul.mubr.bf16.gmra.mrb[0].mxu0 %v778
  %v909 = vpop.f32.mrb[0].mxu0
  %v910 = vadd.f32 0.0, %v909
  %v911 = vpop.f32.mrb[0].mxu0
  %v912 = vpop.f32.mrb[0].mxu0
  %v913 = vadd.f32 0.0, %v912
  %v914 = vpop.f32.mrb[0].mxu0
  %915 = vmatprep.mubr.bf16.mxu0 0
  %916 = vmatmul.mubr.bf16.gmra.mrb[0].mxu0 %v781
  %v917 = vpop.f32.mrb[0].mxu0
  %v918 = vadd.f32 0.0, %v917
  %v919 = vpop.f32.mrb[0].mxu0
  %v920 = vpop.f32.mrb[0].mxu0
  %v921 = vadd.f32 0.0, %v920
  %v922 = vpop.f32.mrb[0].mxu0
  %923 = vmatprep.mubr.bf16.mxu0 0
  %924 = vmatmul.mubr.bf16.gmra.mrb[0].mxu0 %v784
  %v925 = vpop.f32.mrb[0].mxu0
  %v926 = vadd.f32 0.0, %v925
  %v927 = vpop.f32.mrb[0].mxu0
  %v928 = vpop.f32.mrb[0].mxu0
  %v929 = vadd.f32 0.0, %v928
  %v930 = vpop.f32.mrb[0].mxu0
  %931 = vmatprep.mubr.bf16.mxu0 0
  %932 = vmatmul.mubr.bf16.gmra.mrb[0].mxu0 %v787
  %v933 = vpop.f32.mrb[0].mxu0
  %v934 = vadd.f32 0.0, %v933
  %v935 = vpop.f32.mrb[0].mxu0
  %v936 = vpop.f32.mrb[0].mxu0
  %v937 = vadd.f32 0.0, %v936
  %v938 = vpop.f32.mrb[0].mxu0
  %939 = vmatprep.mubr.bf16.mxu0 0
  %940 = vmatmul.mubr.bf16.gmra.mrb[0].mxu0 %v790
  %v941 = vpop.f32.mrb[0].mxu0
  %v942 = vadd.f32 0.0, %v941
  %v943 = vpop.f32.mrb[0].mxu0
  %v944 = vpop.f32.mrb[0].mxu0
  %v945 = vadd.f32 0.0, %v944
  %v946 = vpop.f32.mrb[0].mxu0
  %947 = vmatprep.mubr.bf16.mxu0 0
  %948 = vmatmul.mubr.bf16.gmra.mrb[0].mxu0 %v793
  %v949 = vpop.f32.mrb[0].mxu0
  %v950 = vadd.f32 0.0, %v949
  %v951 = vpop.f32.mrb[0].mxu0
  %v952 = vpop.f32.mrb[0].mxu0
  %v953 = vadd.f32 0.0, %v952
  %v954 = vpop.f32.mrb[0].mxu0
  %955 = vdwg.mxu0
  %v956 = vld [vmem:[%s1] sm:$0xff]
  %v957 = vld [vmem:[%s1 + $0x8] sm:$0xff]
  %v958 = vld [vmem:[%s1 + $0x10] sm:$0xff]
  %v959 = vld [vmem:[%s1 + $0x18] sm:$0xff]
  %v960 = vld [vmem:[%s1 + $0x20] sm:$0xff]
  %v961 = vld [vmem:[%s1 + $0x28] sm:$0xff]
  %v962 = vld [vmem:[%s1 + $0x30] sm:$0xff]
  %v963 = vld [vmem:[%s1 + $0x38] sm:$0xff]
  %v964 = vld [vmem:[%s1 + $0x40] sm:$0xff]
  %v965 = vld [vmem:[%s1 + $0x48] sm:$0xff]
  %v966 = vld [vmem:[%s1 + $0x50] sm:$0xff]
  %v967 = vld [vmem:[%s1 + $0x58] sm:$0xff]
  %v968 = vld [vmem:[%s1 + $0x60] sm:$0xff]
  %v969 = vld [vmem:[%s1 + $0x68] sm:$0xff]
  %v970 = vld [vmem:[%s1 + $0x70] sm:$0xff]
  %v971 = vld [vmem:[%s1 + $0x78] sm:$0xff]
  %v972 = vld [vmem:[%s1 + $0x80] sm:$0xff]
  %v973 = vld [vmem:[%s1 + $0x88] sm:$0xff]
  %v974 = vld [vmem:[%s1 + $0x90] sm:$0xff]
  %v975 = vld [vmem:[%s1 + $0x98] sm:$0xff]
  %v976 = vld [vmem:[%s1 + $0xa0] sm:$0xff]
  %v977 = vld [vmem:[%s1 + $0xa8] sm:$0xff]
  %v978 = vld [vmem:[%s1 + $0xb0] sm:$0xff]
  %v979 = vld [vmem:[%s1 + $0xb8] sm:$0xff]
  %v980 = vld [vmem:[%s1 + $0xc0] sm:$0xff]
  %v981 = vld [vmem:[%s1 + $0xc8] sm:$0xff]
  %v982 = vld [vmem:[%s1 + $0xd0] sm:$0xff]
  %v983 = vld [vmem:[%s1 + $0xd8] sm:$0xff]
  %v984 = vld [vmem:[%s1 + $0xe0] sm:$0xff]
  %v985 = vld [vmem:[%s1 + $0xe8] sm:$0xff]
  %v986 = vld [vmem:[%s1 + $0xf0] sm:$0xff]
  %v987 = vld [vmem:[%s1 + $0xf8] sm:$0xff]
  %vm988 = vcmask 523264
  %v990 = vsel %vm988, %v956, 0
  %v993 = vsel %vm988, %v957, 0
  %v996 = vsel %vm988, %v958, 0
  %v999 = vsel %vm988, %v959, 0
  %v1002 = vsel %vm988, %v960, 0
  %v1005 = vsel %vm988, %v961, 0
  %v1008 = vsel %vm988, %v962, 0
  %v1011 = vsel %vm988, %v963, 0
  %1013 = vmatprep.subr.mxu0 0.0
  %1014 = vmatpush1.msra.mxu0 %v830
  %1015 = vmatprep.subr.mxu0 0.0
  %1016 = vmatpush1.msra.mxu0 %v833
  %1017 = vmatprep.subr.mxu0 0.0
  %1018 = vmatpush1.msra.mxu0 %v838
  %1019 = vmatprep.subr.mxu0 0.0
  %1020 = vmatpush1.msra.mxu0 %v841
  %1021 = vmatprep.subr.mxu0 0.0
  %1022 = vmatpush1.msra.mxu0 %v846
  %1023 = vmatprep.subr.mxu0 0.0
  %1024 = vmatpush1.msra.mxu0 %v849
  %1025 = vmatprep.subr.mxu0 0.0
  %1026 = vmatpush1.msra.mxu0 %v854
  %1027 = vmatprep.subr.mxu0 0.0
  %1028 = vmatpush1.msra.mxu0 %v857
  %1029 = vmatprep.subr.mxu0 0.0
  %1030 = vmatpush1.msra.mxu0 0.0
  %1031 = vmatprep.subr.mxu0 0.0
  %1032 = vmatpush1.msra.mxu0 0.0
  %1033 = vmatprep.subr.mxu0 0.0
  %1034 = vmatpush1.msra.mxu0 0.0
  %1035 = vmatprep.subr.mxu0 0.0
  %1036 = vmatpush1.msra.mxu0 0.0
  %1037 = vmatprep.subr.mxu0 0.0
  %1038 = vmatpush1.msra.mxu0 0.0
  %1039 = vmatprep.subr.mxu0 0.0
  %1040 = vmatpush1.msra.mxu0 0.0
  %1041 = vmatprep.subr.mxu0 0.0
  %1042 = vmatpush1.msra.mxu0 0.0
  %1043 = vmatprep.subr.mxu0 0.0
  %1044 = vmatpush1.msra.mxu0 0.0
  %1045 = vmatprep.subr.mxu0 0.0
  %1046 = vmatpush1.msra.mxu0 0.0
  %1047 = vmatprep.subr.mxu0 0.0
  %1048 = vmatpush1.msra.mxu0 0.0
  %1049 = vmatprep.subr.mxu0 0.0
  %1050 = vmatpush1.msra.mxu0 0.0
  %1051 = vmatprep.subr.mxu0 0.0
  %1052 = vmatpush1.msra.mxu0 0.0
  %1053 = vmatprep.subr.mxu0 0.0
  %1054 = vmatpush1.msra.mxu0 0.0
  %1055 = vmatprep.subr.mxu0 0.0
  %1056 = vmatpush1.msra.mxu0 0.0
  %1057 = vmatprep.subr.mxu0 0.0
  %1058 = vmatpush1.msra.mxu0 0.0
  %1059 = vmatprep.subr.mxu0 0.0
  %1060 = vmatpush1.msra.mxu0 0.0
  %1061 = vmatprep.subr.mxu0 0.0
  %1062 = vmatpush1.msra.mxu0 0.0
  %1063 = vmatprep.subr.mxu0 0.0
  %1064 = vmatpush1.msra.mxu0 0.0
  %1065 = vmatprep.subr.mxu0 0.0
  %1066 = vmatpush1.msra.mxu0 0.0
  %1067 = vmatprep.subr.mxu0 0.0
  %1068 = vmatpush1.msra.mxu0 0.0
  %1069 = vmatprep.subr.mxu0 0.0
  %1070 = vmatpush1.msra.mxu0 0.0
  %1071 = vmatprep.subr.mxu0 0.0
  %1072 = vmatpush1.msra.mxu0 0.0
  %1073 = vmatprep.subr.mxu0 0.0
  %1074 = vmatpush1.msra.mxu0 0.0
  %1075 = vmatprep.subr.mxu0 0.0
  %1076 = vmatpush1.msra.mxu0 0.0
  %1077 = vmatprep.mubr.f32.mxu0 0.0
  %1078 = vmatmul.mubr.f32.gmra.mrb[0].mxu0 %v990
  %v1079 = vpop.f32.mrb[0].mxu0
  %v1080 = vadd.f32 0.0, %v1079
  %v1081 = vpop.f32.mrb[0].mxu0
  %1082 = vmatprep.mubr.f32.mxu0 0.0
  %1083 = vmatmul.mubr.f32.gmra.mrb[0].mxu0 %v993
  %v1084 = vpop.f32.mrb[0].mxu0
  %v1085 = vadd.f32 0.0, %v1084
  %v1086 = vpop.f32.mrb[0].mxu0
  %1087 = vmatprep.mubr.f32.mxu0 0.0
  %1088 = vmatmul.mubr.f32.gmra.mrb[0].mxu0 %v996
  %v1089 = vpop.f32.mrb[0].mxu0
  %v1090 = vadd.f32 0.0, %v1089
  %v1091 = vpop.f32.mrb[0].mxu0
  %1092 = vmatprep.mubr.f32.mxu0 0.0
  %1093 = vmatmul.mubr.f32.gmra.mrb[0].mxu0 %v999
  %v1094 = vpop.f32.mrb[0].mxu0
  %v1095 = vadd.f32 0.0, %v1094
  %v1096 = vpop.f32.mrb[0].mxu0
  %1097 = vmatprep.mubr.f32.mxu0 0.0
  %1098 = vmatmul.mubr.f32.gmra.mrb[0].mxu0 %v1002
  %v1099 = vpop.f32.mrb[0].mxu0
  %v1100 = vadd.f32 0.0, %v1099
  %v1101 = vpop.f32.mrb[0].mxu0
  %1102 = vmatprep.mubr.f32.mxu0 0.0
  %1103 = vmatmul.mubr.f32.gmra.mrb[0].mxu0 %v1005
  %v1104 = vpop.f32.mrb[0].mxu0
  %v1105 = vadd.f32 0.0, %v1104
  %v1106 = vpop.f32.mrb[0].mxu0
  %1107 = vmatprep.mubr.f32.mxu0 0.0
  %1108 = vmatmul.mubr.f32.gmra.mrb[0].mxu0 %v1008
  %v1109 = vpop.f32.mrb[0].mxu0
  %v1110 = vadd.f32 0.0, %v1109
  %v1111 = vpop.f32.mrb[0].mxu0
  %1112 = vmatprep.mubr.f32.mxu0 0.0
  %1113 = vmatmul.mubr.f32.gmra.mrb[0].mxu0 %v1011
  %v1114 = vpop.f32.mrb[0].mxu0
  %v1115 = vadd.f32 0.0, %v1114
  %v1116 = vpop.f32.mrb[0].mxu0
  %1117 = vdwg.mxu0
  %v1119 = vsel %vm988, %v964, 0
  %v1122 = vsel %vm988, %v965, 0
  %v1125 = vsel %vm988, %v966, 0
  %v1128 = vsel %vm988, %v967, 0
  %v1131 = vsel %vm988, %v968, 0
  %v1134 = vsel %vm988, %v969, 0
  %v1137 = vsel %vm988, %v970, 0
  %v1140 = vsel %vm988, %v971, 0
  %1142 = vmatprep.subr.mxu0 0.0
  %1143 = vmatpush1.msra.mxu0 %v862
  %1144 = vmatprep.subr.mxu0 0.0
  %1145 = vmatpush1.msra.mxu0 %v865
  %1146 = vmatprep.subr.mxu0 0.0
  %1147 = vmatpush1.msra.mxu0 %v870
  %1148 = vmatprep.subr.mxu0 0.0
  %1149 = vmatpush1.msra.mxu0 %v873
  %1150 = vmatprep.subr.mxu0 0.0
  %1151 = vmatpush1.msra.mxu0 %v878
  %1152 = vmatprep.subr.mxu0 0.0
  %1153 = vmatpush1.msra.mxu0 %v881
  %1154 = vmatprep.subr.mxu0 0.0
  %1155 = vmatpush1.msra.mxu0 %v886
  %1156 = vmatprep.subr.mxu0 0.0
  %1157 = vmatpush1.msra.mxu0 %v889
  %1158 = vmatprep.subr.mxu0 0.0
  %1159 = vmatpush1.msra.mxu0 0.0
  %1160 = vmatprep.subr.mxu0 0.0
  %1161 = vmatpush1.msra.mxu0 0.0
  %1162 = vmatprep.subr.mxu0 0.0
  %1163 = vmatpush1.msra.mxu0 0.0
  %1164 = vmatprep.subr.mxu0 0.0
  %1165 = vmatpush1.msra.mxu0 0.0
  %1166 = vmatprep.subr.mxu0 0.0
  %1167 = vmatpush1.msra.mxu0 0.0
  %1168 = vmatprep.subr.mxu0 0.0
  %1169 = vmatpush1.msra.mxu0 0.0
  %1170 = vmatprep.subr.mxu0 0.0
  %1171 = vmatpush1.msra.mxu0 0.0
  %1172 = vmatprep.subr.mxu0 0.0
  %1173 = vmatpush1.msra.mxu0 0.0
  %1174 = vmatprep.subr.mxu0 0.0
  %1175 = vmatpush1.msra.mxu0 0.0
  %1176 = vmatprep.subr.mxu0 0.0
  %1177 = vmatpush1.msra.mxu0 0.0
  %1178 = vmatprep.subr.mxu0 0.0
  %1179 = vmatpush1.msra.mxu0 0.0
  %1180 = vmatprep.subr.mxu0 0.0
  %1181 = vmatpush1.msra.mxu0 0.0
  %1182 = vmatprep.subr.mxu0 0.0
  %1183 = vmatpush1.msra.mxu0 0.0
  %1184 = vmatprep.subr.mxu0 0.0
  %1185 = vmatpush1.msra.mxu0 0.0
  %1186 = vmatprep.subr.mxu0 0.0
  %1187 = vmatpush1.msra.mxu0 0.0
  %1188 = vmatprep.subr.mxu0 0.0
  %1189 = vmatpush1.msra.mxu0 0.0
  %1190 = vmatprep.subr.mxu0 0.0
  %1191 = vmatpush1.msra.mxu0 0.0
  %1192 = vmatprep.subr.mxu0 0.0
  %1193 = vmatpush1.msra.mxu0 0.0
  %1194 = vmatprep.subr.mxu0 0.0
  %1195 = vmatpush1.msra.mxu0 0.0
  %1196 = vmatprep.subr.mxu0 0.0
  %1197 = vmatpush1.msra.mxu0 0.0
  %1198 = vmatprep.subr.mxu0 0.0
  %1199 = vmatpush1.msra.mxu0 0.0
  %1200 = vmatprep.subr.mxu0 0.0
  %1201 = vmatpush1.msra.mxu0 0.0
  %1202 = vmatprep.subr.mxu0 0.0
  %1203 = vmatpush1.msra.mxu0 0.0
  %1204 = vmatprep.subr.mxu0 0.0
  %1205 = vmatpush1.msra.mxu0 0.0
  %1206 = vmatprep.mubr.f32.mxu0 0.0
  %1207 = vmatmul.mubr.f32.gmra.mrb[0].mxu0 %v1119
  %v1208 = vpop.f32.mrb[0].mxu0
  %v1209 = vadd.f32 0.0, %v1208
  %v1210 = vpop.f32.mrb[0].mxu0
  %1211 = vmatprep.mubr.f32.mxu0 0.0
  %1212 = vmatmul.mubr.f32.gmra.mrb[0].mxu0 %v1122
  %v1213 = vpop.f32.mrb[0].mxu0
  %v1214 = vadd.f32 0.0, %v1213
  %v1215 = vpop.f32.mrb[0].mxu0
  %1216 = vmatprep.mubr.f32.mxu0 0.0
  %1217 = vmatmul.mubr.f32.gmra.mrb[0].mxu0 %v1125
  %v1218 = vpop.f32.mrb[0].mxu0
  %v1219 = vadd.f32 0.0, %v1218
  %v1220 = vpop.f32.mrb[0].mxu0
  %1221 = vmatprep.mubr.f32.mxu0 0.0
  %1222 = vmatmul.mubr.f32.gmra.mrb[0].mxu0 %v1128
  %v1223 = vpop.f32.mrb[0].mxu0
  %v1224 = vadd.f32 0.0, %v1223
  %v1225 = vpop.f32.mrb[0].mxu0
  %1226 = vmatprep.mubr.f32.mxu0 0.0
  %1227 = vmatmul.mubr.f32.gmra.mrb[0].mxu0 %v1131
  %v1228 = vpop.f32.mrb[0].mxu0
  %v1229 = vadd.f32 0.0, %v1228
  %v1230 = vpop.f32.mrb[0].mxu0
  %1231 = vmatprep.mubr.f32.mxu0 0.0
  %1232 = vmatmul.mubr.f32.gmra.mrb[0].mxu0 %v1134
  %v1233 = vpop.f32.mrb[0].mxu0
  %v1234 = vadd.f32 0.0, %v1233
  %v1235 = vpop.f32.mrb[0].mxu0
  %1236 = vmatprep.mubr.f32.mxu0 0.0
  %1237 = vmatmul.mubr.f32.gmra.mrb[0].mxu0 %v1137
  %v1238 = vpop.f32.mrb[0].mxu0
  %v1239 = vadd.f32 0.0, %v1238
  %v1240 = vpop.f32.mrb[0].mxu0
  %1241 = vmatprep.mubr.f32.mxu0 0.0
  %1242 = vmatmul.mubr.f32.gmra.mrb[0].mxu0 %v1140
  %v1243 = vpop.f32.mrb[0].mxu0
  %v1244 = vadd.f32 0.0, %v1243
  %v1245 = vpop.f32.mrb[0].mxu0
  %1246 = vdwg.mxu0
  %v1248 = vsel %vm988, %v972, 0
  %v1251 = vsel %vm988, %v973, 0
  %v1254 = vsel %vm988, %v974, 0
  %v1257 = vsel %vm988, %v975, 0
  %v1260 = vsel %vm988, %v976, 0
  %v1263 = vsel %vm988, %v977, 0
  %v1266 = vsel %vm988, %v978, 0
  %v1269 = vsel %vm988, %v979, 0
  %1271 = vmatprep.subr.mxu0 0.0
  %1272 = vmatpush1.msra.mxu0 %v894
  %1273 = vmatprep.subr.mxu0 0.0
  %1274 = vmatpush1.msra.mxu0 %v897
  %1275 = vmatprep.subr.mxu0 0.0
  %1276 = vmatpush1.msra.mxu0 %v902
  %1277 = vmatprep.subr.mxu0 0.0
  %1278 = vmatpush1.msra.mxu0 %v905
  %1279 = vmatprep.subr.mxu0 0.0
  %1280 = vmatpush1.msra.mxu0 %v910
  %1281 = vmatprep.subr.mxu0 0.0
  %1282 = vmatpush1.msra.mxu0 %v913
  %1283 = vmatprep.subr.mxu0 0.0
  %1284 = vmatpush1.msra.mxu0 %v918
  %1285 = vmatprep.subr.mxu0 0.0
  %1286 = vmatpush1.msra.mxu0 %v921
  %1287 = vmatprep.subr.mxu0 0.0
  %1288 = vmatpush1.msra.mxu0 0.0
  %1289 = vmatprep.subr.mxu0 0.0
  %1290 = vmatpush1.msra.mxu0 0.0
  %1291 = vmatprep.subr.mxu0 0.0
  %1292 = vmatpush1.msra.mxu0 0.0
  %1293 = vmatprep.subr.mxu0 0.0
  %1294 = vmatpush1.msra.mxu0 0.0
  %1295 = vmatprep.subr.mxu0 0.0
  %1296 = vmatpush1.msra.mxu0 0.0
  %1297 = vmatprep.subr.mxu0 0.0
  %1298 = vmatpush1.msra.mxu0 0.0
  %1299 = vmatprep.subr.mxu0 0.0
  %1300 = vmatpush1.msra.mxu0 0.0
  %1301 = vmatprep.subr.mxu0 0.0
  %1302 = vmatpush1.msra.mxu0 0.0
  %1303 = vmatprep.subr.mxu0 0.0
  %1304 = vmatpush1.msra.mxu0 0.0
  %1305 = vmatprep.subr.mxu0 0.0
  %1306 = vmatpush1.msra.mxu0 0.0
  %1307 = vmatprep.subr.mxu0 0.0
  %1308 = vmatpush1.msra.mxu0 0.0
  %1309 = vmatprep.subr.mxu0 0.0
  %1310 = vmatpush1.msra.mxu0 0.0
  %1311 = vmatprep.subr.mxu0 0.0
  %1312 = vmatpush1.msra.mxu0 0.0
  %1313 = vmatprep.subr.mxu0 0.0
  %1314 = vmatpush1.msra.mxu0 0.0
  %1315 = vmatprep.subr.mxu0 0.0
  %1316 = vmatpush1.msra.mxu0 0.0
  %1317 = vmatprep.subr.mxu0 0.0
  %1318 = vmatpush1.msra.mxu0 0.0
  %1319 = vmatprep.subr.mxu0 0.0
  %1320 = vmatpush1.msra.mxu0 0.0
  %1321 = vmatprep.subr.mxu0 0.0
  %1322 = vmatpush1.msra.mxu0 0.0
  %1323 = vmatprep.subr.mxu0 0.0
  %1324 = vmatpush1.msra.mxu0 0.0
  %1325 = vmatprep.subr.mxu0 0.0
  %1326 = vmatpush1.msra.mxu0 0.0
  %1327 = vmatprep.subr.mxu0 0.0
  %1328 = vmatpush1.msra.mxu0 0.0
  %1329 = vmatprep.subr.mxu0 0.0
  %1330 = vmatpush1.msra.mxu0 0.0
  %1331 = vmatprep.subr.mxu0 0.0
  %1332 = vmatpush1.msra.mxu0 0.0
  %1333 = vmatprep.subr.mxu0 0.0
  %1334 = vmatpush1.msra.mxu0 0.0
  %1335 = vmatprep.mubr.f32.mxu0 0.0
  %1336 = vmatmul.mubr.f32.gmra.mrb[0].mxu0 %v1248
  %v1337 = vpop.f32.mrb[0].mxu0
  %v1338 = vadd.f32 0.0, %v1337
  %v1339 = vpop.f32.mrb[0].mxu0
  %1340 = vmatprep.mubr.f32.mxu0 0.0
  %1341 = vmatmul.mubr.f32.gmra.mrb[0].mxu0 %v1251
  %v1342 = vpop.f32.mrb[0].mxu0
  %v1343 = vadd.f32 0.0, %v1342
  %v1344 = vpop.f32.mrb[0].mxu0
  %1345 = vmatprep.mubr.f32.mxu0 0.0
  %1346 = vmatmul.mubr.f32.gmra.mrb[0].mxu0 %v1254
  %v1347 = vpop.f32.mrb[0].mxu0
  %v1348 = vadd.f32 0.0, %v1347
  %v1349 = vpop.f32.mrb[0].mxu0
  %1350 = vmatprep.mubr.f32.mxu0 0.0
  %1351 = vmatmul.mubr.f32.gmra.mrb[0].mxu0 %v1257
  %v1352 = vpop.f32.mrb[0].mxu0
  %v1353 = vadd.f32 0.0, %v1352
  %v1354 = vpop.f32.mrb[0].mxu0
  %1355 = vmatprep.mubr.f32.mxu0 0.0
  %1356 = vmatmul.mubr.f32.gmra.mrb[0].mxu0 %v1260
  %v1357 = vpop.f32.mrb[0].mxu0
  %v1358 = vadd.f32 0.0, %v1357
  %v1359 = vpop.f32.mrb[0].mxu0
  %1360 = vmatprep.mubr.f32.mxu0 0.0
  %1361 = vmatmul.mubr.f32.gmra.mrb[0].mxu0 %v1263
  %v1362 = vpop.f32.mrb[0].mxu0
  %v1363 = vadd.f32 0.0, %v1362
  %v1364 = vpop.f32.mrb[0].mxu0
  %1365 = vmatprep.mubr.f32.mxu0 0.0
  %1366 = vmatmul.mubr.f32.gmra.mrb[0].mxu0 %v1266
  %v1367 = vpop.f32.mrb[0].mxu0
  %v1368 = vadd.f32 0.0, %v1367
  %v1369 = vpop.f32.mrb[0].mxu0
  %1370 = vmatprep.mubr.f32.mxu0 0.0
  %1371 = vmatmul.mubr.f32.gmra.mrb[0].mxu0 %v1269
  %v1372 = vpop.f32.mrb[0].mxu0
  %v1373 = vadd.f32 0.0, %v1372
  %v1374 = vpop.f32.mrb[0].mxu0
  %1375 = vdwg.mxu0
  %v1377 = vsel %vm988, %v980, 0
  %v1380 = vsel %vm988, %v981, 0
  %v1383 = vsel %vm988, %v982, 0
  %v1386 = vsel %vm988, %v983, 0
  %v1389 = vsel %vm988, %v984, 0
  %v1392 = vsel %vm988, %v985, 0
  %v1395 = vsel %vm988, %v986, 0
  %v1398 = vsel %vm988, %v987, 0
  %1400 = vmatprep.subr.mxu0 0.0
  %1401 = vmatpush1.msra.mxu0 %v926
  %1402 = vmatprep.subr.mxu0 0.0
  %1403 = vmatpush1.msra.mxu0 %v929
  %1404 = vmatprep.subr.mxu0 0.0
  %1405 = vmatpush1.msra.mxu0 %v934
  %1406 = vmatprep.subr.mxu0 0.0
  %1407 = vmatpush1.msra.mxu0 %v937
  %1408 = vmatprep.subr.mxu0 0.0
  %1409 = vmatpush1.msra.mxu0 %v942
  %1410 = vmatprep.subr.mxu0 0.0
  %1411 = vmatpush1.msra.mxu0 %v945
  %1412 = vmatprep.subr.mxu0 0.0
  %1413 = vmatpush1.msra.mxu0 %v950
  %1414 = vmatprep.subr.mxu0 0.0
  %1415 = vmatpush1.msra.mxu0 %v953
  %1416 = vmatprep.subr.mxu0 0.0
  %1417 = vmatpush1.msra.mxu0 0.0
  %1418 = vmatprep.subr.mxu0 0.0
  %1419 = vmatpush1.msra.mxu0 0.0
  %1420 = vmatprep.subr.mxu0 0.0
  %1421 = vmatpush1.msra.mxu0 0.0
  %1422 = vmatprep.subr.mxu0 0.0
  %1423 = vmatpush1.msra.mxu0 0.0
  %1424 = vmatprep.subr.mxu0 0.0
  %1425 = vmatpush1.msra.mxu0 0.0
  %1426 = vmatprep.subr.mxu0 0.0
  %1427 = vmatpush1.msra.mxu0 0.0
  %1428 = vmatprep.subr.mxu0 0.0
  %1429 = vmatpush1.msra.mxu0 0.0
  %1430 = vmatprep.subr.mxu0 0.0
  %1431 = vmatpush1.msra.mxu0 0.0
  %1432 = vmatprep.subr.mxu0 0.0
  %1433 = vmatpush1.msra.mxu0 0.0
  %1434 = vmatprep.subr.mxu0 0.0
  %1435 = vmatpush1.msra.mxu0 0.0
  %1436 = vmatprep.subr.mxu0 0.0
  %1437 = vmatpush1.msra.mxu0 0.0
  %1438 = vmatprep.subr.mxu0 0.0
  %1439 = vmatpush1.msra.mxu0 0.0
  %1440 = vmatprep.subr.mxu0 0.0
  %1441 = vmatpush1.msra.mxu0 0.0
  %1442 = vmatprep.subr.mxu0 0.0
  %1443 = vmatpush1.msra.mxu0 0.0
  %1444 = vmatprep.subr.mxu0 0.0
  %1445 = vmatpush1.msra.mxu0 0.0
  %1446 = vmatprep.subr.mxu0 0.0
  %1447 = vmatpush1.msra.mxu0 0.0
  %1448 = vmatprep.subr.mxu0 0.0
  %1449 = vmatpush1.msra.mxu0 0.0
  %1450 = vmatprep.subr.mxu0 0.0
  %1451 = vmatpush1.msra.mxu0 0.0
  %1452 = vmatprep.subr.mxu0 0.0
  %1453 = vmatpush1.msra.mxu0 0.0
  %1454 = vmatprep.subr.mxu0 0.0
  %1455 = vmatpush1.msra.mxu0 0.0
  %1456 = vmatprep.subr.mxu0 0.0
  %1457 = vmatpush1.msra.mxu0 0.0
  %1458 = vmatprep.subr.mxu0 0.0
  %1459 = vmatpush1.msra.mxu0 0.0
  %1460 = vmatprep.subr.mxu0 0.0
  %1461 = vmatpush1.msra.mxu0 0.0
  %1462 = vmatprep.subr.mxu0 0.0
  %1463 = vmatpush1.msra.mxu0 0.0
  %1464 = vmatprep.mubr.f32.mxu0 0.0
  %1465 = vmatmul.mubr.f32.gmra.mrb[0].mxu0 %v1377
  %v1466 = vpop.f32.mrb[0].mxu0
  %v1467 = vadd.f32 0.0, %v1466
  %v1468 = vpop.f32.mrb[0].mxu0
  %1469 = vmatprep.mubr.f32.mxu0 0.0
  %1470 = vmatmul.mubr.f32.gmra.mrb[0].mxu0 %v1380
  %v1471 = vpop.f32.mrb[0].mxu0
  %v1472 = vadd.f32 0.0, %v1471
  %v1473 = vpop.f32.mrb[0].mxu0
  %1474 = vmatprep.mubr.f32.mxu0 0.0
  %1475 = vmatmul.mubr.f32.gmra.mrb[0].mxu0 %v1383
  %v1476 = vpop.f32.mrb[0].mxu0
  %v1477 = vadd.f32 0.0, %v1476
  %v1478 = vpop.f32.mrb[0].mxu0
  %1479 = vmatprep.mubr.f32.mxu0 0.0
  %1480 = vmatmul.mubr.f32.gmra.mrb[0].mxu0 %v1386
  %v1481 = vpop.f32.mrb[0].mxu0
  %v1482 = vadd.f32 0.0, %v1481
  %v1483 = vpop.f32.mrb[0].mxu0
  %1484 = vmatprep.mubr.f32.mxu0 0.0
  %1485 = vmatmul.mubr.f32.gmra.mrb[0].mxu0 %v1389
  %v1486 = vpop.f32.mrb[0].mxu0
  %v1487 = vadd.f32 0.0, %v1486
  %v1488 = vpop.f32.mrb[0].mxu0
  %1489 = vmatprep.mubr.f32.mxu0 0.0
  %1490 = vmatmul.mubr.f32.gmra.mrb[0].mxu0 %v1392
  %v1491 = vpop.f32.mrb[0].mxu0
  %v1492 = vadd.f32 0.0, %v1491
  %v1493 = vpop.f32.mrb[0].mxu0
  %1494 = vmatprep.mubr.f32.mxu0 0.0
  %1495 = vmatmul.mubr.f32.gmra.mrb[0].mxu0 %v1395
  %v1496 = vpop.f32.mrb[0].mxu0
  %v1497 = vadd.f32 0.0, %v1496
  %v1498 = vpop.f32.mrb[0].mxu0
  %1499 = vmatprep.mubr.f32.mxu0 0.0
  %1500 = vmatmul.mubr.f32.gmra.mrb[0].mxu0 %v1398
  %v1501 = vpop.f32.mrb[0].mxu0
  %v1502 = vadd.f32 0.0, %v1501
  %v1503 = vpop.f32.mrb[0].mxu0
  %1504 = vdwg.mxu0
  %v1505 = vadd.f32 %v18, %v1080
  %v1506 = vadd.f32 %v19, %v1085
  %v1507 = vadd.f32 %v20, %v1090
  %v1508 = vadd.f32 %v21, %v1095
  %v1509 = vadd.f32 %v22, %v1100
  %v1510 = vadd.f32 %v23, %v1105
  %v1511 = vadd.f32 %v24, %v1110
  %v1512 = vadd.f32 %v25, %v1115
  %v1513 = vadd.f32 %v26, %v1209
  %v1514 = vadd.f32 %v27, %v1214
  %v1515 = vadd.f32 %v28, %v1219
  %v1516 = vadd.f32 %v29, %v1224
  %v1517 = vadd.f32 %v30, %v1229
  %v1518 = vadd.f32 %v31, %v1234
  %v1519 = vadd.f32 %v32, %v1239
  %v1520 = vadd.f32 %v33, %v1244
  %v1521 = vadd.f32 %v34, %v1338
  %v1522 = vadd.f32 %v35, %v1343
  %v1523 = vadd.f32 %v36, %v1348
  %v1524 = vadd.f32 %v37, %v1353
  %v1525 = vadd.f32 %v38, %v1358
  %v1526 = vadd.f32 %v39, %v1363
  %v1527 = vadd.f32 %v40, %v1368
  %v1528 = vadd.f32 %v41, %v1373
  %v1529 = vadd.f32 %v42, %v1467
  %v1530 = vadd.f32 %v43, %v1472
  %v1531 = vadd.f32 %v44, %v1477
  %v1532 = vadd.f32 %v45, %v1482
  %v1533 = vadd.f32 %v46, %v1487
  %v1534 = vadd.f32 %v47, %v1492
  %v1535 = vadd.f32 %v48, %v1497
  %v1536 = vadd.f32 %v49, %v1502
  %v1537 = vlaneseq
  %v1538 = vshrl.u32 %v1537, 7
  %v1539 = vsub.s32 0, %v1538
  %v1540 = vrot.slane %v52, %v1539
  %v1541 = vadd.f32 %v1505, %v1540
  %v1542 = vadd.f32 %v1506, %v1540
  %v1543 = vadd.f32 %v1507, %v1540
  %v1544 = vadd.f32 %v1508, %v1540
  %v1545 = vadd.f32 %v1509, %v1540
  %v1546 = vadd.f32 %v1510, %v1540
  %v1547 = vadd.f32 %v1511, %v1540
  %v1548 = vadd.f32 %v1512, %v1540
  %v1549 = vadd.f32 %v1513, %v1540
  %v1550 = vadd.f32 %v1514, %v1540
  %v1551 = vadd.f32 %v1515, %v1540
  %v1552 = vadd.f32 %v1516, %v1540
  %v1553 = vadd.f32 %v1517, %v1540
  %v1554 = vadd.f32 %v1518, %v1540
  %v1555 = vadd.f32 %v1519, %v1540
  %v1556 = vadd.f32 %v1520, %v1540
  %v1557 = vadd.f32 %v1521, %v1540
  %v1558 = vadd.f32 %v1522, %v1540
  %v1559 = vadd.f32 %v1523, %v1540
  %v1560 = vadd.f32 %v1524, %v1540
  %v1561 = vadd.f32 %v1525, %v1540
  %v1562 = vadd.f32 %v1526, %v1540
  %v1563 = vadd.f32 %v1527, %v1540
  %v1564 = vadd.f32 %v1528, %v1540
  %v1565 = vadd.f32 %v1529, %v1540
  %v1566 = vadd.f32 %v1530, %v1540
  %v1567 = vadd.f32 %v1531, %v1540
  %v1568 = vadd.f32 %v1532, %v1540
  %v1569 = vadd.f32 %v1533, %v1540
  %v1570 = vadd.f32 %v1534, %v1540
  %v1571 = vadd.f32 %v1535, %v1540
  %v1572 = vadd.f32 %v1536, %v1540
  %v1573 = vsel %vm69, %v1541, 0.0
  %1574 = vadd.xlane.f32.xlu0 %v1573
  %v1575 = vpop.xlane.xlu0 %1574
  %v1576 = vsel %vm69, %v1542, 0.0
  %1577 = vadd.xlane.f32.xlu0 %v1576
  %v1578 = vpop.xlane.xlu0 %1577
  %v1579 = vsel %vm69, %v1543, 0.0
  %1580 = vadd.xlane.f32.xlu0 %v1579
  %v1581 = vpop.xlane.xlu0 %1580
  %v1582 = vsel %vm69, %v1544, 0.0
  %1583 = vadd.xlane.f32.xlu0 %v1582
  %v1584 = vpop.xlane.xlu0 %1583
  %v1585 = vsel %vm69, %v1545, 0.0
  %1586 = vadd.xlane.f32.xlu0 %v1585
  %v1587 = vpop.xlane.xlu0 %1586
  %v1588 = vsel %vm69, %v1546, 0.0
  %1589 = vadd.xlane.f32.xlu0 %v1588
  %v1590 = vpop.xlane.xlu0 %1589
  %v1591 = vsel %vm69, %v1547, 0.0
  %1592 = vadd.xlane.f32.xlu0 %v1591
  %v1593 = vpop.xlane.xlu0 %1592
  %v1594 = vsel %vm69, %v1548, 0.0
  %1595 = vadd.xlane.f32.xlu0 %v1594
  %v1596 = vpop.xlane.xlu0 %1595
  %v1597 = vsel %vm69, %v1549, 0.0
  %1598 = vadd.xlane.f32.xlu0 %v1597
  %v1599 = vpop.xlane.xlu0 %1598
  %v1600 = vsel %vm69, %v1550, 0.0
  %1601 = vadd.xlane.f32.xlu0 %v1600
  %v1602 = vpop.xlane.xlu0 %1601
  %v1603 = vsel %vm69, %v1551, 0.0
  %1604 = vadd.xlane.f32.xlu0 %v1603
  %v1605 = vpop.xlane.xlu0 %1604
  %v1606 = vsel %vm69, %v1552, 0.0
  %1607 = vadd.xlane.f32.xlu0 %v1606
  %v1608 = vpop.xlane.xlu0 %1607
  %v1609 = vsel %vm69, %v1553, 0.0
  %1610 = vadd.xlane.f32.xlu0 %v1609
  %v1611 = vpop.xlane.xlu0 %1610
  %v1612 = vsel %vm69, %v1554, 0.0
  %1613 = vadd.xlane.f32.xlu0 %v1612
  %v1614 = vpop.xlane.xlu0 %1613
  %v1615 = vsel %vm69, %v1555, 0.0
  %1616 = vadd.xlane.f32.xlu0 %v1615
  %v1617 = vpop.xlane.xlu0 %1616
  %v1618 = vsel %vm69, %v1556, 0.0
  %1619 = vadd.xlane.f32.xlu0 %v1618
  %v1620 = vpop.xlane.xlu0 %1619
  %v1621 = vsel %vm69, %v1557, 0.0
  %1622 = vadd.xlane.f32.xlu0 %v1621
  %v1623 = vpop.xlane.xlu0 %1622
  %v1624 = vsel %vm69, %v1558, 0.0
  %1625 = vadd.xlane.f32.xlu0 %v1624
  %v1626 = vpop.xlane.xlu0 %1625
  %v1627 = vsel %vm69, %v1559, 0.0
  %1628 = vadd.xlane.f32.xlu0 %v1627
  %v1629 = vpop.xlane.xlu0 %1628
  %v1630 = vsel %vm69, %v1560, 0.0
  %1631 = vadd.xlane.f32.xlu0 %v1630
  %v1632 = vpop.xlane.xlu0 %1631
  %v1633 = vsel %vm69, %v1561, 0.0
  %1634 = vadd.xlane.f32.xlu0 %v1633
  %v1635 = vpop.xlane.xlu0 %1634
  %v1636 = vsel %vm69, %v1562, 0.0
  %1637 = vadd.xlane.f32.xlu0 %v1636
  %v1638 = vpop.xlane.xlu0 %1637
  %v1639 = vsel %vm69, %v1563, 0.0
  %1640 = vadd.xlane.f32.xlu0 %v1639
  %v1641 = vpop.xlane.xlu0 %1640
  %v1642 = vsel %vm69, %v1564, 0.0
  %1643 = vadd.xlane.f32.xlu0 %v1642
  %v1644 = vpop.xlane.xlu0 %1643
  %v1645 = vsel %vm69, %v1565, 0.0
  %1646 = vadd.xlane.f32.xlu0 %v1645
  %v1647 = vpop.xlane.xlu0 %1646
  %v1648 = vsel %vm69, %v1566, 0.0
  %1649 = vadd.xlane.f32.xlu0 %v1648
  %v1650 = vpop.xlane.xlu0 %1649
  %v1651 = vsel %vm69, %v1567, 0.0
  %1652 = vadd.xlane.f32.xlu0 %v1651
  %v1653 = vpop.xlane.xlu0 %1652
  %v1654 = vsel %vm69, %v1568, 0.0
  %1655 = vadd.xlane.f32.xlu0 %v1654
  %v1656 = vpop.xlane.xlu0 %1655
  %v1657 = vsel %vm69, %v1569, 0.0
  %1658 = vadd.xlane.f32.xlu0 %v1657
  %v1659 = vpop.xlane.xlu0 %1658
  %v1660 = vsel %vm69, %v1570, 0.0
  %1661 = vadd.xlane.f32.xlu0 %v1660
  %v1662 = vpop.xlane.xlu0 %1661
  %v1663 = vsel %vm69, %v1571, 0.0
  %1664 = vadd.xlane.f32.xlu0 %v1663
  %v1665 = vpop.xlane.xlu0 %1664
  %v1666 = vsel %vm69, %v1572, 0.0
  %1667 = vadd.xlane.f32.xlu0 %v1666
  %v1668 = vpop.xlane.xlu0 %1667
  %v1669 = vmul.f32 %v1575, %v166
  %v1670 = vmul.f32 %v1578, %v166
  %v1671 = vmul.f32 %v1581, %v166
  %v1672 = vmul.f32 %v1584, %v166
  %v1673 = vmul.f32 %v1587, %v166
  %v1674 = vmul.f32 %v1590, %v166
  %v1675 = vmul.f32 %v1593, %v166
  %v1676 = vmul.f32 %v1596, %v166
  %v1677 = vmul.f32 %v1599, %v166
  %v1678 = vmul.f32 %v1602, %v166
  %v1679 = vmul.f32 %v1605, %v166
  %v1680 = vmul.f32 %v1608, %v166
  %v1681 = vmul.f32 %v1611, %v166
  %v1682 = vmul.f32 %v1614, %v166
  %v1683 = vmul.f32 %v1617, %v166
  %v1684 = vmul.f32 %v1620, %v166
  %v1685 = vmul.f32 %v1623, %v166
  %v1686 = vmul.f32 %v1626, %v166
  %v1687 = vmul.f32 %v1629, %v166
  %v1688 = vmul.f32 %v1632, %v166
  %v1689 = vmul.f32 %v1635, %v166
  %v1690 = vmul.f32 %v1638, %v166
  %v1691 = vmul.f32 %v1641, %v166
  %v1692 = vmul.f32 %v1644, %v166
  %v1693 = vmul.f32 %v1647, %v166
  %v1694 = vmul.f32 %v1650, %v166
  %v1695 = vmul.f32 %v1653, %v166
  %v1696 = vmul.f32 %v1656, %v166
  %v1697 = vmul.f32 %v1659, %v166
  %v1698 = vmul.f32 %v1662, %v166
  %v1699 = vmul.f32 %v1665, %v166
  %v1700 = vmul.f32 %v1668, %v166
  %v1701 = vsub.f32 %v1541, %v1669
  %v1702 = vsub.f32 %v1542, %v1670
  %v1703 = vsub.f32 %v1543, %v1671
  %v1704 = vsub.f32 %v1544, %v1672
  %v1705 = vsub.f32 %v1545, %v1673
  %v1706 = vsub.f32 %v1546, %v1674
  %v1707 = vsub.f32 %v1547, %v1675
  %v1708 = vsub.f32 %v1548, %v1676
  %v1709 = vsub.f32 %v1549, %v1677
  %v1710 = vsub.f32 %v1550, %v1678
  %v1711 = vsub.f32 %v1551, %v1679
  %v1712 = vsub.f32 %v1552, %v1680
  %v1713 = vsub.f32 %v1553, %v1681
  %v1714 = vsub.f32 %v1554, %v1682
  %v1715 = vsub.f32 %v1555, %v1683
  %v1716 = vsub.f32 %v1556, %v1684
  %v1717 = vsub.f32 %v1557, %v1685
  %v1718 = vsub.f32 %v1558, %v1686
  %v1719 = vsub.f32 %v1559, %v1687
  %v1720 = vsub.f32 %v1560, %v1688
  %v1721 = vsub.f32 %v1561, %v1689
  %v1722 = vsub.f32 %v1562, %v1690
  %v1723 = vsub.f32 %v1563, %v1691
  %v1724 = vsub.f32 %v1564, %v1692
  %v1725 = vsub.f32 %v1565, %v1693
  %v1726 = vsub.f32 %v1566, %v1694
  %v1727 = vsub.f32 %v1567, %v1695
  %v1728 = vsub.f32 %v1568, %v1696
  %v1729 = vsub.f32 %v1569, %v1697
  %v1730 = vsub.f32 %v1570, %v1698
  %v1731 = vsub.f32 %v1571, %v1699
  %v1732 = vsub.f32 %v1572, %v1700
  %v1733 = vmul.f32 %v1701, %v1701
  %v1734 = vmul.f32 %v1702, %v1702
  %v1735 = vmul.f32 %v1703, %v1703
  %v1736 = vmul.f32 %v1704, %v1704
  %v1737 = vmul.f32 %v1705, %v1705
  %v1738 = vmul.f32 %v1706, %v1706
  %v1739 = vmul.f32 %v1707, %v1707
  %v1740 = vmul.f32 %v1708, %v1708
  %v1741 = vmul.f32 %v1709, %v1709
  %v1742 = vmul.f32 %v1710, %v1710
  %v1743 = vmul.f32 %v1711, %v1711
  %v1744 = vmul.f32 %v1712, %v1712
  %v1745 = vmul.f32 %v1713, %v1713
  %v1746 = vmul.f32 %v1714, %v1714
  %v1747 = vmul.f32 %v1715, %v1715
  %v1748 = vmul.f32 %v1716, %v1716
  %v1749 = vmul.f32 %v1717, %v1717
  %v1750 = vmul.f32 %v1718, %v1718
  %v1751 = vmul.f32 %v1719, %v1719
  %v1752 = vmul.f32 %v1720, %v1720
  %v1753 = vmul.f32 %v1721, %v1721
  %v1754 = vmul.f32 %v1722, %v1722
  %v1755 = vmul.f32 %v1723, %v1723
  %v1756 = vmul.f32 %v1724, %v1724
  %v1757 = vmul.f32 %v1725, %v1725
  %v1758 = vmul.f32 %v1726, %v1726
  %v1759 = vmul.f32 %v1727, %v1727
  %v1760 = vmul.f32 %v1728, %v1728
  %v1761 = vmul.f32 %v1729, %v1729
  %v1762 = vmul.f32 %v1730, %v1730
  %v1763 = vmul.f32 %v1731, %v1731
  %v1764 = vmul.f32 %v1732, %v1732
  %v1765 = vsel %vm69, %v1733, 0.0
  %1766 = vadd.xlane.f32.xlu0 %v1765
  %v1767 = vpop.xlane.xlu0 %1766
  %v1768 = vsel %vm69, %v1734, 0.0
  %1769 = vadd.xlane.f32.xlu0 %v1768
  %v1770 = vpop.xlane.xlu0 %1769
  %v1771 = vsel %vm69, %v1735, 0.0
  %1772 = vadd.xlane.f32.xlu0 %v1771
  %v1773 = vpop.xlane.xlu0 %1772
  %v1774 = vsel %vm69, %v1736, 0.0
  %1775 = vadd.xlane.f32.xlu0 %v1774
  %v1776 = vpop.xlane.xlu0 %1775
  %v1777 = vsel %vm69, %v1737, 0.0
  %1778 = vadd.xlane.f32.xlu0 %v1777
  %v1779 = vpop.xlane.xlu0 %1778
  %v1780 = vsel %vm69, %v1738, 0.0
  %1781 = vadd.xlane.f32.xlu0 %v1780
  %v1782 = vpop.xlane.xlu0 %1781
  %v1783 = vsel %vm69, %v1739, 0.0
  %1784 = vadd.xlane.f32.xlu0 %v1783
  %v1785 = vpop.xlane.xlu0 %1784
  %v1786 = vsel %vm69, %v1740, 0.0
  %1787 = vadd.xlane.f32.xlu0 %v1786
  %v1788 = vpop.xlane.xlu0 %1787
  %v1789 = vsel %vm69, %v1741, 0.0
  %1790 = vadd.xlane.f32.xlu0 %v1789
  %v1791 = vpop.xlane.xlu0 %1790
  %v1792 = vsel %vm69, %v1742, 0.0
  %1793 = vadd.xlane.f32.xlu0 %v1792
  %v1794 = vpop.xlane.xlu0 %1793
  %v1795 = vsel %vm69, %v1743, 0.0
  %1796 = vadd.xlane.f32.xlu0 %v1795
  %v1797 = vpop.xlane.xlu0 %1796
  %v1798 = vsel %vm69, %v1744, 0.0
  %1799 = vadd.xlane.f32.xlu0 %v1798
  %v1800 = vpop.xlane.xlu0 %1799
  %v1801 = vsel %vm69, %v1745, 0.0
  %1802 = vadd.xlane.f32.xlu0 %v1801
  %v1803 = vpop.xlane.xlu0 %1802
  %v1804 = vsel %vm69, %v1746, 0.0
  %1805 = vadd.xlane.f32.xlu0 %v1804
  %v1806 = vpop.xlane.xlu0 %1805
  %v1807 = vsel %vm69, %v1747, 0.0
  %1808 = vadd.xlane.f32.xlu0 %v1807
  %v1809 = vpop.xlane.xlu0 %1808
  %v1810 = vsel %vm69, %v1748, 0.0
  %1811 = vadd.xlane.f32.xlu0 %v1810
  %v1812 = vpop.xlane.xlu0 %1811
  %v1813 = vsel %vm69, %v1749, 0.0
  %1814 = vadd.xlane.f32.xlu0 %v1813
  %v1815 = vpop.xlane.xlu0 %1814
  %v1816 = vsel %vm69, %v1750, 0.0
  %1817 = vadd.xlane.f32.xlu0 %v1816
  %v1818 = vpop.xlane.xlu0 %1817
  %v1819 = vsel %vm69, %v1751, 0.0
  %1820 = vadd.xlane.f32.xlu0 %v1819
  %v1821 = vpop.xlane.xlu0 %1820
  %v1822 = vsel %vm69, %v1752, 0.0
  %1823 = vadd.xlane.f32.xlu0 %v1822
  %v1824 = vpop.xlane.xlu0 %1823
  %v1825 = vsel %vm69, %v1753, 0.0
  %1826 = vadd.xlane.f32.xlu0 %v1825
  %v1827 = vpop.xlane.xlu0 %1826
  %v1828 = vsel %vm69, %v1754, 0.0
  %1829 = vadd.xlane.f32.xlu0 %v1828
  %v1830 = vpop.xlane.xlu0 %1829
  %v1831 = vsel %vm69, %v1755, 0.0
  %1832 = vadd.xlane.f32.xlu0 %v1831
  %v1833 = vpop.xlane.xlu0 %1832
  %v1834 = vsel %vm69, %v1756, 0.0
  %1835 = vadd.xlane.f32.xlu0 %v1834
  %v1836 = vpop.xlane.xlu0 %1835
  %v1837 = vsel %vm69, %v1757, 0.0
  %1838 = vadd.xlane.f32.xlu0 %v1837
  %v1839 = vpop.xlane.xlu0 %1838
  %v1840 = vsel %vm69, %v1758, 0.0
  %1841 = vadd.xlane.f32.xlu0 %v1840
  %v1842 = vpop.xlane.xlu0 %1841
  %v1843 = vsel %vm69, %v1759, 0.0
  %1844 = vadd.xlane.f32.xlu0 %v1843
  %v1845 = vpop.xlane.xlu0 %1844
  %v1846 = vsel %vm69, %v1760, 0.0
  %1847 = vadd.xlane.f32.xlu0 %v1846
  %v1848 = vpop.xlane.xlu0 %1847
  %v1849 = vsel %vm69, %v1761, 0.0
  %1850 = vadd.xlane.f32.xlu0 %v1849
  %v1851 = vpop.xlane.xlu0 %1850
  %v1852 = vsel %vm69, %v1762, 0.0
  %1853 = vadd.xlane.f32.xlu0 %v1852
  %v1854 = vpop.xlane.xlu0 %1853
  %v1855 = vsel %vm69, %v1763, 0.0
  %1856 = vadd.xlane.f32.xlu0 %v1855
  %v1857 = vpop.xlane.xlu0 %1856
  %v1858 = vsel %vm69, %v1764, 0.0
  %1859 = vadd.xlane.f32.xlu0 %v1858
  %v1860 = vpop.xlane.xlu0 %1859
  %v1861 = vmul.f32 %v1767, %v166
  %v1862 = vmul.f32 %v1770, %v166
  %v1863 = vmul.f32 %v1773, %v166
  %v1864 = vmul.f32 %v1776, %v166
  %v1865 = vmul.f32 %v1779, %v166
  %v1866 = vmul.f32 %v1782, %v166
  %v1867 = vmul.f32 %v1785, %v166
  %v1868 = vmul.f32 %v1788, %v166
  %v1869 = vmul.f32 %v1791, %v166
  %v1870 = vmul.f32 %v1794, %v166
  %v1871 = vmul.f32 %v1797, %v166
  %v1872 = vmul.f32 %v1800, %v166
  %v1873 = vmul.f32 %v1803, %v166
  %v1874 = vmul.f32 %v1806, %v166
  %v1875 = vmul.f32 %v1809, %v166
  %v1876 = vmul.f32 %v1812, %v166
  %v1877 = vmul.f32 %v1815, %v166
  %v1878 = vmul.f32 %v1818, %v166
  %v1879 = vmul.f32 %v1821, %v166
  %v1880 = vmul.f32 %v1824, %v166
  %v1881 = vmul.f32 %v1827, %v166
  %v1882 = vmul.f32 %v1830, %v166
  %v1883 = vmul.f32 %v1833, %v166
  %v1884 = vmul.f32 %v1836, %v166
  %v1885 = vmul.f32 %v1839, %v166
  %v1886 = vmul.f32 %v1842, %v166
  %v1887 = vmul.f32 %v1845, %v166
  %v1888 = vmul.f32 %v1848, %v166
  %v1889 = vmul.f32 %v1851, %v166
  %v1890 = vmul.f32 %v1854, %v166
  %v1891 = vmul.f32 %v1857, %v166
  %v1892 = vmul.f32 %v1860, %v166
  %v1893 = vadd.f32 %v1861, 1e-05
  %v1894 = vadd.f32 %v1862, 1e-05
  %v1895 = vadd.f32 %v1863, 1e-05
  %v1896 = vadd.f32 %v1864, 1e-05
  %v1897 = vadd.f32 %v1865, 1e-05
  %v1898 = vadd.f32 %v1866, 1e-05
  %v1899 = vadd.f32 %v1867, 1e-05
  %v1900 = vadd.f32 %v1868, 1e-05
  %v1901 = vadd.f32 %v1869, 1e-05
  %v1902 = vadd.f32 %v1870, 1e-05
  %v1903 = vadd.f32 %v1871, 1e-05
  %v1904 = vadd.f32 %v1872, 1e-05
  %v1905 = vadd.f32 %v1873, 1e-05
  %v1906 = vadd.f32 %v1874, 1e-05
  %v1907 = vadd.f32 %v1875, 1e-05
  %v1908 = vadd.f32 %v1876, 1e-05
  %v1909 = vadd.f32 %v1877, 1e-05
  %v1910 = vadd.f32 %v1878, 1e-05
  %v1911 = vadd.f32 %v1879, 1e-05
  %v1912 = vadd.f32 %v1880, 1e-05
  %v1913 = vadd.f32 %v1881, 1e-05
  %v1914 = vadd.f32 %v1882, 1e-05
  %v1915 = vadd.f32 %v1883, 1e-05
  %v1916 = vadd.f32 %v1884, 1e-05
  %v1917 = vadd.f32 %v1885, 1e-05
  %v1918 = vadd.f32 %v1886, 1e-05
  %v1919 = vadd.f32 %v1887, 1e-05
  %v1920 = vadd.f32 %v1888, 1e-05
  %v1921 = vadd.f32 %v1889, 1e-05
  %v1922 = vadd.f32 %v1890, 1e-05
  %v1923 = vadd.f32 %v1891, 1e-05
  %v1924 = vadd.f32 %v1892, 1e-05
  %v1925 = vrsqrt.pop %v1893
  %v1926 = vrsqrt.pop %v1894
  %v1927 = vrsqrt.pop %v1895
  %v1928 = vrsqrt.pop %v1896
  %v1929 = vrsqrt.pop %v1897
  %v1930 = vrsqrt.pop %v1898
  %v1931 = vrsqrt.pop %v1899
  %v1932 = vrsqrt.pop %v1900
  %v1933 = vrsqrt.pop %v1901
  %v1934 = vrsqrt.pop %v1902
  %v1935 = vrsqrt.pop %v1903
  %v1936 = vrsqrt.pop %v1904
  %v1937 = vrsqrt.pop %v1905
  %v1938 = vrsqrt.pop %v1906
  %v1939 = vrsqrt.pop %v1907
  %v1940 = vrsqrt.pop %v1908
  %v1941 = vrsqrt.pop %v1909
  %v1942 = vrsqrt.pop %v1910
  %v1943 = vrsqrt.pop %v1911
  %v1944 = vrsqrt.pop %v1912
  %v1945 = vrsqrt.pop %v1913
  %v1946 = vrsqrt.pop %v1914
  %v1947 = vrsqrt.pop %v1915
  %v1948 = vrsqrt.pop %v1916
  %v1949 = vrsqrt.pop %v1917
  %v1950 = vrsqrt.pop %v1918
  %v1951 = vrsqrt.pop %v1919
  %v1952 = vrsqrt.pop %v1920
  %v1953 = vrsqrt.pop %v1921
  %v1954 = vrsqrt.pop %v1922
  %v1955 = vrsqrt.pop %v1923
  %v1956 = vrsqrt.pop %v1924
  %v1957 = vmul.f32 %v1701, %v1925
  %v1958 = vmul.f32 %v1702, %v1926
  %v1959 = vmul.f32 %v1703, %v1927
  %v1960 = vmul.f32 %v1704, %v1928
  %v1961 = vmul.f32 %v1705, %v1929
  %v1962 = vmul.f32 %v1706, %v1930
  %v1963 = vmul.f32 %v1707, %v1931
  %v1964 = vmul.f32 %v1708, %v1932
  %v1965 = vmul.f32 %v1709, %v1933
  %v1966 = vmul.f32 %v1710, %v1934
  %v1967 = vmul.f32 %v1711, %v1935
  %v1968 = vmul.f32 %v1712, %v1936
  %v1969 = vmul.f32 %v1713, %v1937
  %v1970 = vmul.f32 %v1714, %v1938
  %v1971 = vmul.f32 %v1715, %v1939
  %v1972 = vmul.f32 %v1716, %v1940
  %v1973 = vmul.f32 %v1717, %v1941
  %v1974 = vmul.f32 %v1718, %v1942
  %v1975 = vmul.f32 %v1719, %v1943
  %v1976 = vmul.f32 %v1720, %v1944
  %v1977 = vmul.f32 %v1721, %v1945
  %v1978 = vmul.f32 %v1722, %v1946
  %v1979 = vmul.f32 %v1723, %v1947
  %v1980 = vmul.f32 %v1724, %v1948
  %v1981 = vmul.f32 %v1725, %v1949
  %v1982 = vmul.f32 %v1726, %v1950
  %v1983 = vmul.f32 %v1727, %v1951
  %v1984 = vmul.f32 %v1728, %v1952
  %v1985 = vmul.f32 %v1729, %v1953
  %v1986 = vmul.f32 %v1730, %v1954
  %v1987 = vmul.f32 %v1731, %v1955
  %v1988 = vmul.f32 %v1732, %v1956
  %v1989 = vlaneseq
  %v1990 = vshrl.u32 %v1989, 7
  %v1991 = vsub.s32 0, %v1990
  %v1992 = vrot.slane %v53, %v1991
  %v1993 = vmul.f32 %v1957, %v1992
  %v1994 = vmul.f32 %v1958, %v1992
  %v1995 = vmul.f32 %v1959, %v1992
  %v1996 = vmul.f32 %v1960, %v1992
  %v1997 = vmul.f32 %v1961, %v1992
  %v1998 = vmul.f32 %v1962, %v1992
  %v1999 = vmul.f32 %v1963, %v1992
  %v2000 = vmul.f32 %v1964, %v1992
  %v2001 = vmul.f32 %v1965, %v1992
  %v2002 = vmul.f32 %v1966, %v1992
  %v2003 = vmul.f32 %v1967, %v1992
  %v2004 = vmul.f32 %v1968, %v1992
  %v2005 = vmul.f32 %v1969, %v1992
  %v2006 = vmul.f32 %v1970, %v1992
  %v2007 = vmul.f32 %v1971, %v1992
  %v2008 = vmul.f32 %v1972, %v1992
  %v2009 = vmul.f32 %v1973, %v1992
  %v2010 = vmul.f32 %v1974, %v1992
  %v2011 = vmul.f32 %v1975, %v1992
  %v2012 = vmul.f32 %v1976, %v1992
  %v2013 = vmul.f32 %v1977, %v1992
  %v2014 = vmul.f32 %v1978, %v1992
  %v2015 = vmul.f32 %v1979, %v1992
  %v2016 = vmul.f32 %v1980, %v1992
  %v2017 = vmul.f32 %v1981, %v1992
  %v2018 = vmul.f32 %v1982, %v1992
  %v2019 = vmul.f32 %v1983, %v1992
  %v2020 = vmul.f32 %v1984, %v1992
  %v2021 = vmul.f32 %v1985, %v1992
  %v2022 = vmul.f32 %v1986, %v1992
  %v2023 = vmul.f32 %v1987, %v1992
  %v2024 = vmul.f32 %v1988, %v1992
  %v2025 = vlaneseq
  %v2026 = vshrl.u32 %v2025, 7
  %v2027 = vsub.s32 0, %v2026
  %v2028 = vrot.slane %v54, %v2027
  %v2029 = vadd.f32 %v1993, %v2028
  %v2030 = vadd.f32 %v1994, %v2028
  %v2031 = vadd.f32 %v1995, %v2028
  %v2032 = vadd.f32 %v1996, %v2028
  %v2033 = vadd.f32 %v1997, %v2028
  %v2034 = vadd.f32 %v1998, %v2028
  %v2035 = vadd.f32 %v1999, %v2028
  %v2036 = vadd.f32 %v2000, %v2028
  %v2037 = vadd.f32 %v2001, %v2028
  %v2038 = vadd.f32 %v2002, %v2028
  %v2039 = vadd.f32 %v2003, %v2028
  %v2040 = vadd.f32 %v2004, %v2028
  %v2041 = vadd.f32 %v2005, %v2028
  %v2042 = vadd.f32 %v2006, %v2028
  %v2043 = vadd.f32 %v2007, %v2028
  %v2044 = vadd.f32 %v2008, %v2028
  %v2045 = vadd.f32 %v2009, %v2028
  %v2046 = vadd.f32 %v2010, %v2028
  %v2047 = vadd.f32 %v2011, %v2028
  %v2048 = vadd.f32 %v2012, %v2028
  %v2049 = vadd.f32 %v2013, %v2028
  %v2050 = vadd.f32 %v2014, %v2028
  %v2051 = vadd.f32 %v2015, %v2028
  %v2052 = vadd.f32 %v2016, %v2028
  %v2053 = vadd.f32 %v2017, %v2028
  %v2054 = vadd.f32 %v2018, %v2028
  %v2055 = vadd.f32 %v2019, %v2028
  %v2056 = vadd.f32 %v2020, %v2028
  %v2057 = vadd.f32 %v2021, %v2028
  %v2058 = vadd.f32 %v2022, %v2028
  %v2059 = vadd.f32 %v2023, %v2028
  %v2060 = vadd.f32 %v2024, %v2028
  %v2061 = vpack.c.bf16 %v2030, %v2029
  %v2062 = vpack.c.bf16 %v2032, %v2031
  %v2063 = vpack.c.bf16 %v2034, %v2033
  %v2064 = vpack.c.bf16 %v2036, %v2035
  %v2065 = vpack.c.bf16 %v2038, %v2037
  %v2066 = vpack.c.bf16 %v2040, %v2039
  %v2067 = vpack.c.bf16 %v2042, %v2041
  %v2068 = vpack.c.bf16 %v2044, %v2043
  %v2069 = vpack.c.bf16 %v2046, %v2045
  %v2070 = vpack.c.bf16 %v2048, %v2047
  %v2071 = vpack.c.bf16 %v2050, %v2049
  %v2072 = vpack.c.bf16 %v2052, %v2051
  %v2073 = vpack.c.bf16 %v2054, %v2053
  %v2074 = vpack.c.bf16 %v2056, %v2055
  %v2075 = vpack.c.bf16 %v2058, %v2057
  %v2076 = vpack.c.bf16 %v2060, %v2059
  %v2077 = vlaneseq
  %v2078 = vshrl.u32 %v2077, 7
  %v2079 = vsub.s32 0, %v2078
  %v2080 = vrot.slane %v56, %v2079
  %v2085 = vunpack.c.l.b16 %v57
  %v2086 = vunpack.c.l.b16 %v58
  %v2087 = vunpack.c.l.b16 %v59
  %v2088 = vunpack.c.l.b16 %v60
  %v2089 = vpack.c.b16 %v2086, %v2085
  %v2090 = vpack.c.b16 %v2088, %v2087
  %v2094 = vsel %vm69, %v2061, 0
  %v2097 = vsel %vm69, %v2062, 0
  %v2100 = vsel %vm69, %v2063, 0
  %v2103 = vsel %vm69, %v2064, 0
  %v2106 = vsel %vm69, %v2065, 0
  %v2109 = vsel %vm69, %v2066, 0
  %v2112 = vsel %vm69, %v2067, 0
  %v2115 = vsel %vm69, %v2068, 0
  %v2118 = vsel %vm69, %v2069, 0
  %v2121 = vsel %vm69, %v2070, 0
  %v2124 = vsel %vm69, %v2071, 0
  %v2127 = vsel %vm69, %v2072, 0
  %v2130 = vsel %vm69, %v2073, 0
  %v2133 = vsel %vm69, %v2074, 0
  %v2136 = vsel %vm69, %v2075, 0
  %v2139 = vsel %vm69, %v2076, 0
  %2141 = vmatprep.subr.bf16.mxu0 0
  %2142 = vmatpush1.bf16.msra.mxu0 %v2089
  %2143 = vmatprep.subr.bf16.mxu0 0
  %2144 = vmatpush1.bf16.msra.mxu0 %v2090
  %2145 = vmatprep.subr.bf16.mxu0 0
  %2146 = vmatpush1.bf16.msra.mxu0 0
  %2147 = vmatprep.subr.bf16.mxu0 0
  %2148 = vmatpush1.bf16.msra.mxu0 0
  %2149 = vmatprep.subr.bf16.mxu0 0
  %2150 = vmatpush1.bf16.msra.mxu0 0
  %2151 = vmatprep.subr.bf16.mxu0 0
  %2152 = vmatpush1.bf16.msra.mxu0 0
  %2153 = vmatprep.subr.bf16.mxu0 0
  %2154 = vmatpush1.bf16.msra.mxu0 0
  %2155 = vmatprep.subr.bf16.mxu0 0
  %2156 = vmatpush1.bf16.msra.mxu0 0
  %2157 = vmatprep.subr.bf16.mxu0 0
  %2158 = vmatpush1.bf16.msra.mxu0 0
  %2159 = vmatprep.subr.bf16.mxu0 0
  %2160 = vmatpush1.bf16.msra.mxu0 0
  %2161 = vmatprep.subr.bf16.mxu0 0
  %2162 = vmatpush1.bf16.msra.mxu0 0
  %2163 = vmatprep.subr.bf16.mxu0 0
  %2164 = vmatpush1.bf16.msra.mxu0 0
  %2165 = vmatprep.subr.bf16.mxu0 0
  %2166 = vmatpush1.bf16.msra.mxu0 0
  %2167 = vmatprep.subr.bf16.mxu0 0
  %2168 = vmatpush1.bf16.msra.mxu0 0
  %2169 = vmatprep.subr.bf16.mxu0 0
  %2170 = vmatpush1.bf16.msra.mxu0 0
  %2171 = vmatprep.subr.bf16.mxu0 0
  %2172 = vmatpush1.bf16.msra.mxu0 0
  %2173 = vmatprep.mubr.bf16.mxu0 0
  %2174 = vmatmul.mubr.bf16.gmra.mrb[0].mxu0 %v2094
  %v2175 = vpop.f32.mrb[0].mxu0
  %v2176 = vadd.f32 %v2080, %v2175
  %v2177 = vpop.f32.mrb[0].mxu0
  %v2178 = vpop.f32.mrb[0].mxu0
  %v2179 = vadd.f32 %v2080, %v2178
  %v2180 = vpop.f32.mrb[0].mxu0
  %2181 = vmatprep.mubr.bf16.mxu0 0
  %2182 = vmatmul.mubr.bf16.gmra.mrb[0].mxu0 %v2097
  %v2183 = vpop.f32.mrb[0].mxu0
  %v2184 = vadd.f32 %v2080, %v2183
  %v2185 = vpop.f32.mrb[0].mxu0
  %v2186 = vpop.f32.mrb[0].mxu0
  %v2187 = vadd.f32 %v2080, %v2186
  %v2188 = vpop.f32.mrb[0].mxu0
  %2189 = vmatprep.mubr.bf16.mxu0 0
  %2190 = vmatmul.mubr.bf16.gmra.mrb[0].mxu0 %v2100
  %v2191 = vpop.f32.mrb[0].mxu0
  %v2192 = vadd.f32 %v2080, %v2191
  %v2193 = vpop.f32.mrb[0].mxu0
  %v2194 = vpop.f32.mrb[0].mxu0
  %v2195 = vadd.f32 %v2080, %v2194
  %v2196 = vpop.f32.mrb[0].mxu0
  %2197 = vmatprep.mubr.bf16.mxu0 0
  %2198 = vmatmul.mubr.bf16.gmra.mrb[0].mxu0 %v2103
  %v2199 = vpop.f32.mrb[0].mxu0
  %v2200 = vadd.f32 %v2080, %v2199
  %v2201 = vpop.f32.mrb[0].mxu0
  %v2202 = vpop.f32.mrb[0].mxu0
  %v2203 = vadd.f32 %v2080, %v2202
  %v2204 = vpop.f32.mrb[0].mxu0
  %2205 = vmatprep.mubr.bf16.mxu0 0
  %2206 = vmatmul.mubr.bf16.gmra.mrb[0].mxu0 %v2106
  %v2207 = vpop.f32.mrb[0].mxu0
  %v2208 = vadd.f32 %v2080, %v2207
  %v2209 = vpop.f32.mrb[0].mxu0
  %v2210 = vpop.f32.mrb[0].mxu0
  %v2211 = vadd.f32 %v2080, %v2210
  %v2212 = vpop.f32.mrb[0].mxu0
  %2213 = vmatprep.mubr.bf16.mxu0 0
  %2214 = vmatmul.mubr.bf16.gmra.mrb[0].mxu0 %v2109
  %v2215 = vpop.f32.mrb[0].mxu0
  %v2216 = vadd.f32 %v2080, %v2215
  %v2217 = vpop.f32.mrb[0].mxu0
  %v2218 = vpop.f32.mrb[0].mxu0
  %v2219 = vadd.f32 %v2080, %v2218
  %v2220 = vpop.f32.mrb[0].mxu0
  %2221 = vmatprep.mubr.bf16.mxu0 0
  %2222 = vmatmul.mubr.bf16.gmra.mrb[0].mxu0 %v2112
  %v2223 = vpop.f32.mrb[0].mxu0
  %v2224 = vadd.f32 %v2080, %v2223
  %v2225 = vpop.f32.mrb[0].mxu0
  %v2226 = vpop.f32.mrb[0].mxu0
  %v2227 = vadd.f32 %v2080, %v2226
  %v2228 = vpop.f32.mrb[0].mxu0
  %2229 = vmatprep.mubr.bf16.mxu0 0
  %2230 = vmatmul.mubr.bf16.gmra.mrb[0].mxu0 %v2115
  %v2231 = vpop.f32.mrb[0].mxu0
  %v2232 = vadd.f32 %v2080, %v2231
  %v2233 = vpop.f32.mrb[0].mxu0
  %v2234 = vpop.f32.mrb[0].mxu0
  %v2235 = vadd.f32 %v2080, %v2234
  %v2236 = vpop.f32.mrb[0].mxu0
  %2237 = vmatprep.mubr.bf16.mxu0 0
  %2238 = vmatmul.mubr.bf16.gmra.mrb[0].mxu0 %v2118
  %v2239 = vpop.f32.mrb[0].mxu0
  %v2240 = vadd.f32 %v2080, %v2239
  %v2241 = vpop.f32.mrb[0].mxu0
  %v2242 = vpop.f32.mrb[0].mxu0
  %v2243 = vadd.f32 %v2080, %v2242
  %v2244 = vpop.f32.mrb[0].mxu0
  %2245 = vmatprep.mubr.bf16.mxu0 0
  %2246 = vmatmul.mubr.bf16.gmra.mrb[0].mxu0 %v2121
  %v2247 = vpop.f32.mrb[0].mxu0
  %v2248 = vadd.f32 %v2080, %v2247
  %v2249 = vpop.f32.mrb[0].mxu0
  %v2250 = vpop.f32.mrb[0].mxu0
  %v2251 = vadd.f32 %v2080, %v2250
  %v2252 = vpop.f32.mrb[0].mxu0
  %2253 = vmatprep.mubr.bf16.mxu0 0
  %2254 = vmatmul.mubr.bf16.gmra.mrb[0].mxu0 %v2124
  %v2255 = vpop.f32.mrb[0].mxu0
  %v2256 = vadd.f32 %v2080, %v2255
  %v2257 = vpop.f32.mrb[0].mxu0
  %v2258 = vpop.f32.mrb[0].mxu0
  %v2259 = vadd.f32 %v2080, %v2258
  %v2260 = vpop.f32.mrb[0].mxu0
  %2261 = vmatprep.mubr.bf16.mxu0 0
  %2262 = vmatmul.mubr.bf16.gmra.mrb[0].mxu0 %v2127
  %v2263 = vpop.f32.mrb[0].mxu0
  %v2264 = vadd.f32 %v2080, %v2263
  %v2265 = vpop.f32.mrb[0].mxu0
  %v2266 = vpop.f32.mrb[0].mxu0
  %v2267 = vadd.f32 %v2080, %v2266
  %v2268 = vpop.f32.mrb[0].mxu0
  %2269 = vmatprep.mubr.bf16.mxu0 0
  %2270 = vmatmul.mubr.bf16.gmra.mrb[0].mxu0 %v2130
  %v2271 = vpop.f32.mrb[0].mxu0
  %v2272 = vadd.f32 %v2080, %v2271
  %v2273 = vpop.f32.mrb[0].mxu0
  %v2274 = vpop.f32.mrb[0].mxu0
  %v2275 = vadd.f32 %v2080, %v2274
  %v2276 = vpop.f32.mrb[0].mxu0
  %2277 = vmatprep.mubr.bf16.mxu0 0
  %2278 = vmatmul.mubr.bf16.gmra.mrb[0].mxu0 %v2133
  %v2279 = vpop.f32.mrb[0].mxu0
  %v2280 = vadd.f32 %v2080, %v2279
  %v2281 = vpop.f32.mrb[0].mxu0
  %v2282 = vpop.f32.mrb[0].mxu0
  %v2283 = vadd.f32 %v2080, %v2282
  %v2284 = vpop.f32.mrb[0].mxu0
  %2285 = vmatprep.mubr.bf16.mxu0 0
  %2286 = vmatmul.mubr.bf16.gmra.mrb[0].mxu0 %v2136
  %v2287 = vpop.f32.mrb[0].mxu0
  %v2288 = vadd.f32 %v2080, %v2287
  %v2289 = vpop.f32.mrb[0].mxu0
  %v2290 = vpop.f32.mrb[0].mxu0
  %v2291 = vadd.f32 %v2080, %v2290
  %v2292 = vpop.f32.mrb[0].mxu0
  %2293 = vmatprep.mubr.bf16.mxu0 0
  %2294 = vmatmul.mubr.bf16.gmra.mrb[0].mxu0 %v2139
  %v2295 = vpop.f32.mrb[0].mxu0
  %v2296 = vadd.f32 %v2080, %v2295
  %v2297 = vpop.f32.mrb[0].mxu0
  %v2298 = vpop.f32.mrb[0].mxu0
  %v2299 = vadd.f32 %v2080, %v2298
  %v2300 = vpop.f32.mrb[0].mxu0
  %2301 = vdwg.mxu0
  %v2302 = vmul.f32 %v2176, 0.5
  %v2303 = vmul.f32 %v2179, 0.5
  %v2304 = vmul.f32 %v2184, 0.5
  %v2305 = vmul.f32 %v2187, 0.5
  %v2306 = vmul.f32 %v2192, 0.5
  %v2307 = vmul.f32 %v2195, 0.5
  %v2308 = vmul.f32 %v2200, 0.5
  %v2309 = vmul.f32 %v2203, 0.5
  %v2310 = vmul.f32 %v2208, 0.5
  %v2311 = vmul.f32 %v2211, 0.5
  %v2312 = vmul.f32 %v2216, 0.5
  %v2313 = vmul.f32 %v2219, 0.5
  %v2314 = vmul.f32 %v2224, 0.5
  %v2315 = vmul.f32 %v2227, 0.5
  %v2316 = vmul.f32 %v2232, 0.5
  %v2317 = vmul.f32 %v2235, 0.5
  %v2318 = vmul.f32 %v2240, 0.5
  %v2319 = vmul.f32 %v2243, 0.5
  %v2320 = vmul.f32 %v2248, 0.5
  %v2321 = vmul.f32 %v2251, 0.5
  %v2322 = vmul.f32 %v2256, 0.5
  %v2323 = vmul.f32 %v2259, 0.5
  %v2324 = vmul.f32 %v2264, 0.5
  %v2325 = vmul.f32 %v2267, 0.5
  %v2326 = vmul.f32 %v2272, 0.5
  %v2327 = vmul.f32 %v2275, 0.5
  %v2328 = vmul.f32 %v2280, 0.5
  %v2329 = vmul.f32 %v2283, 0.5
  %v2330 = vmul.f32 %v2288, 0.5
  %v2331 = vmul.f32 %v2291, 0.5
  %v2332 = vmul.f32 %v2296, 0.5
  %v2333 = vmul.f32 %v2299, 0.5
  %v2334 = vmul.f32 %v2176, 0.70710677
  %v2335 = vmul.f32 %v2179, 0.70710677
  %v2336 = vmul.f32 %v2184, 0.70710677
  %v2337 = vmul.f32 %v2187, 0.70710677
  %v2338 = vmul.f32 %v2192, 0.70710677
  %v2339 = vmul.f32 %v2195, 0.70710677
  %v2340 = vmul.f32 %v2200, 0.70710677
  %v2341 = vmul.f32 %v2203, 0.70710677
  %v2342 = vmul.f32 %v2208, 0.70710677
  %v2343 = vmul.f32 %v2211, 0.70710677
  %v2344 = vmul.f32 %v2216, 0.70710677
  %v2345 = vmul.f32 %v2219, 0.70710677
  %v2346 = vmul.f32 %v2224, 0.70710677
  %v2347 = vmul.f32 %v2227, 0.70710677
  %v2348 = vmul.f32 %v2232, 0.70710677
  %v2349 = vmul.f32 %v2235, 0.70710677
  %v2350 = vmul.f32 %v2240, 0.70710677
  %v2351 = vmul.f32 %v2243, 0.70710677
  %v2352 = vmul.f32 %v2248, 0.70710677
  %v2353 = vmul.f32 %v2251, 0.70710677
  %v2354 = vmul.f32 %v2256, 0.70710677
  %v2355 = vmul.f32 %v2259, 0.70710677
  %v2356 = vmul.f32 %v2264, 0.70710677
  %v2357 = vmul.f32 %v2267, 0.70710677
  %v2358 = vmul.f32 %v2272, 0.70710677
  %v2359 = vmul.f32 %v2275, 0.70710677
  %v2360 = vmul.f32 %v2280, 0.70710677
  %v2361 = vmul.f32 %v2283, 0.70710677
  %v2362 = vmul.f32 %v2288, 0.70710677
  %v2363 = vmul.f32 %v2291, 0.70710677
  %v2364 = vmul.f32 %v2296, 0.70710677
  %v2365 = vmul.f32 %v2299, 0.70710677
  %v2366 = verf.f32.pop %v2334
  %v2367 = verf.f32.pop %v2335
  %v2368 = verf.f32.pop %v2336
  %v2369 = verf.f32.pop %v2337
  %v2370 = verf.f32.pop %v2338
  %v2371 = verf.f32.pop %v2339
  %v2372 = verf.f32.pop %v2340
  %v2373 = verf.f32.pop %v2341
  %v2374 = verf.f32.pop %v2342
  %v2375 = verf.f32.pop %v2343
  %v2376 = verf.f32.pop %v2344
  %v2377 = verf.f32.pop %v2345
  %v2378 = verf.f32.pop %v2346
  %v2379 = verf.f32.pop %v2347
  %v2380 = verf.f32.pop %v2348
  %v2381 = verf.f32.pop %v2349
  %v2382 = verf.f32.pop %v2350
  %v2383 = verf.f32.pop %v2351
  %v2384 = verf.f32.pop %v2352
  %v2385 = verf.f32.pop %v2353
  %v2386 = verf.f32.pop %v2354
  %v2387 = verf.f32.pop %v2355
  %v2388 = verf.f32.pop %v2356
  %v2389 = verf.f32.pop %v2357
  %v2390 = verf.f32.pop %v2358
  %v2391 = verf.f32.pop %v2359
  %v2392 = verf.f32.pop %v2360
  %v2393 = verf.f32.pop %v2361
  %v2394 = verf.f32.pop %v2362
  %v2395 = verf.f32.pop %v2363
  %v2396 = verf.f32.pop %v2364
  %v2397 = verf.f32.pop %v2365
  %v2398 = vadd.f32 %v2366, 1.0
  %v2399 = vadd.f32 %v2367, 1.0
  %v2400 = vadd.f32 %v2368, 1.0
  %v2401 = vadd.f32 %v2369, 1.0
  %v2402 = vadd.f32 %v2370, 1.0
  %v2403 = vadd.f32 %v2371, 1.0
  %v2404 = vadd.f32 %v2372, 1.0
  %v2405 = vadd.f32 %v2373, 1.0
  %v2406 = vadd.f32 %v2374, 1.0
  %v2407 = vadd.f32 %v2375, 1.0
  %v2408 = vadd.f32 %v2376, 1.0
  %v2409 = vadd.f32 %v2377, 1.0
  %v2410 = vadd.f32 %v2378, 1.0
  %v2411 = vadd.f32 %v2379, 1.0
  %v2412 = vadd.f32 %v2380, 1.0
  %v2413 = vadd.f32 %v2381, 1.0
  %v2414 = vadd.f32 %v2382, 1.0
  %v2415 = vadd.f32 %v2383, 1.0
  %v2416 = vadd.f32 %v2384, 1.0
  %v2417 = vadd.f32 %v2385, 1.0
  %v2418 = vadd.f32 %v2386, 1.0
  %v2419 = vadd.f32 %v2387, 1.0
  %v2420 = vadd.f32 %v2388, 1.0
  %v2421 = vadd.f32 %v2389, 1.0
  %v2422 = vadd.f32 %v2390, 1.0
  %v2423 = vadd.f32 %v2391, 1.0
  %v2424 = vadd.f32 %v2392, 1.0
  %v2425 = vadd.f32 %v2393, 1.0
  %v2426 = vadd.f32 %v2394, 1.0
  %v2427 = vadd.f32 %v2395, 1.0
  %v2428 = vadd.f32 %v2396, 1.0
  %v2429 = vadd.f32 %v2397, 1.0
  %v2430 = vmul.f32 %v2302, %v2398
  %v2431 = vmul.f32 %v2303, %v2399
  %v2432 = vmul.f32 %v2304, %v2400
  %v2433 = vmul.f32 %v2305, %v2401
  %v2434 = vmul.f32 %v2306, %v2402
  %v2435 = vmul.f32 %v2307, %v2403
  %v2436 = vmul.f32 %v2308, %v2404
  %v2437 = vmul.f32 %v2309, %v2405
  %v2438 = vmul.f32 %v2310, %v2406
  %v2439 = vmul.f32 %v2311, %v2407
  %v2440 = vmul.f32 %v2312, %v2408
  %v2441 = vmul.f32 %v2313, %v2409
  %v2442 = vmul.f32 %v2314, %v2410
  %v2443 = vmul.f32 %v2315, %v2411
  %v2444 = vmul.f32 %v2316, %v2412
  %v2445 = vmul.f32 %v2317, %v2413
  %v2446 = vmul.f32 %v2318, %v2414
  %v2447 = vmul.f32 %v2319, %v2415
  %v2448 = vmul.f32 %v2320, %v2416
  %v2449 = vmul.f32 %v2321, %v2417
  %v2450 = vmul.f32 %v2322, %v2418
  %v2451 = vmul.f32 %v2323, %v2419
  %v2452 = vmul.f32 %v2324, %v2420
  %v2453 = vmul.f32 %v2325, %v2421
  %v2454 = vmul.f32 %v2326, %v2422
  %v2455 = vmul.f32 %v2327, %v2423
  %v2456 = vmul.f32 %v2328, %v2424
  %v2457 = vmul.f32 %v2329, %v2425
  %v2458 = vmul.f32 %v2330, %v2426
  %v2459 = vmul.f32 %v2331, %v2427
  %v2460 = vmul.f32 %v2332, %v2428
  %v2461 = vmul.f32 %v2333, %v2429
  %v2462 = vpack.c.bf16 %v2431, %v2430
  %v2463 = vpack.c.bf16 %v2433, %v2432
  %v2464 = vpack.c.bf16 %v2435, %v2434
  %v2465 = vpack.c.bf16 %v2437, %v2436
  %v2466 = vpack.c.bf16 %v2439, %v2438
  %v2467 = vpack.c.bf16 %v2441, %v2440
  %v2468 = vpack.c.bf16 %v2443, %v2442
  %v2469 = vpack.c.bf16 %v2445, %v2444
  %v2470 = vpack.c.bf16 %v2447, %v2446
  %v2471 = vpack.c.bf16 %v2449, %v2448
  %v2472 = vpack.c.bf16 %v2451, %v2450
  %v2473 = vpack.c.bf16 %v2453, %v2452
  %v2474 = vpack.c.bf16 %v2455, %v2454
  %v2475 = vpack.c.bf16 %v2457, %v2456
  %v2476 = vpack.c.bf16 %v2459, %v2458
  %v2477 = vpack.c.bf16 %v2461, %v2460
  %v2478 = vlaneseq
  %v2479 = vshrl.u32 %v2478, 7
  %v2480 = vsub.s32 0, %v2479
  %v2481 = vrot.slane %v55, %v2480
  %v2486 = vunpack.c.l.b16 %v61
  %v2487 = vunpack.c.l.b16 %v62
  %v2488 = vunpack.c.l.b16 %v63
  %v2489 = vunpack.c.l.b16 %v64
  %v2490 = vpack.c.b16 %v2487, %v2486
  %v2491 = vpack.c.b16 %v2489, %v2488
  %2494 = vmatprep.subr.bf16.mxu0 0
  %2495 = vmatpush1.bf16.xpose.msra.mxu0 %v2490
  %2496 = vmatprep.subr.bf16.mxu0 0
  %2497 = vmatpush1.bf16.xpose.msra.mxu0 %v2491
  %2498 = vmatprep.subr.bf16.mxu0 0
  %2499 = vmatpush1.bf16.xpose.msra.mxu0 0
  %2500 = vmatprep.subr.bf16.mxu0 0
  %2501 = vmatpush1.bf16.xpose.msra.mxu0 0
  %2502 = vmatprep.subr.bf16.mxu0 0
  %2503 = vmatpush1.bf16.xpose.msra.mxu0 0
  %2504 = vmatprep.subr.bf16.mxu0 0
  %2505 = vmatpush1.bf16.xpose.msra.mxu0 0
  %2506 = vmatprep.subr.bf16.mxu0 0
  %2507 = vmatpush1.bf16.xpose.msra.mxu0 0
  %2508 = vmatprep.subr.bf16.mxu0 0
  %2509 = vmatpush1.bf16.xpose.msra.mxu0 0
  %2510 = vmatprep.subr.bf16.mxu0 0
  %2511 = vmatpush1.bf16.xpose.msra.mxu0 0
  %2512 = vmatprep.subr.bf16.mxu0 0
  %2513 = vmatpush1.bf16.xpose.msra.mxu0 0
  %2514 = vmatprep.subr.bf16.mxu0 0
  %2515 = vmatpush1.bf16.xpose.msra.mxu0 0
  %2516 = vmatprep.subr.bf16.mxu0 0
  %2517 = vmatpush1.bf16.xpose.msra.mxu0 0
  %2518 = vmatprep.subr.bf16.mxu0 0
  %2519 = vmatpush1.bf16.xpose.msra.mxu0 0
  %2520 = vmatprep.subr.bf16.mxu0 0
  %2521 = vmatpush1.bf16.xpose.msra.mxu0 0
  %2522 = vmatprep.subr.bf16.mxu0 0
  %2523 = vmatpush1.bf16.xpose.msra.mxu0 0
  %2524 = vmatprep.subr.bf16.mxu0 0
  %2525 = vmatpush1.bf16.xpose.msra.mxu0 0
  %2526 = vmatprep.mubr.bf16.mxu0 0
  %2527 = vmatmul.mubr.bf16.gmra.mrb[0].mxu0 %v2462
  %v2528 = vpop.f32.mrb[0].mxu0
  %v2529 = vadd.f32 %v2481, %v2528
  %v2530 = vpop.f32.mrb[0].mxu0
  %v2531 = vpop.f32.mrb[0].mxu0
  %v2532 = vadd.f32 %v2481, %v2531
  %v2533 = vpop.f32.mrb[0].mxu0
  %2534 = vmatprep.mubr.bf16.mxu0 0
  %2535 = vmatmul.mubr.bf16.gmra.mrb[0].mxu0 %v2463
  %v2536 = vpop.f32.mrb[0].mxu0
  %v2537 = vadd.f32 %v2481, %v2536
  %v2538 = vpop.f32.mrb[0].mxu0
  %v2539 = vpop.f32.mrb[0].mxu0
  %v2540 = vadd.f32 %v2481, %v2539
  %v2541 = vpop.f32.mrb[0].mxu0
  %2542 = vmatprep.mubr.bf16.mxu0 0
  %2543 = vmatmul.mubr.bf16.gmra.mrb[0].mxu0 %v2464
  %v2544 = vpop.f32.mrb[0].mxu0
  %v2545 = vadd.f32 %v2481, %v2544
  %v2546 = vpop.f32.mrb[0].mxu0
  %v2547 = vpop.f32.mrb[0].mxu0
  %v2548 = vadd.f32 %v2481, %v2547
  %v2549 = vpop.f32.mrb[0].mxu0
  %2550 = vmatprep.mubr.bf16.mxu0 0
  %2551 = vmatmul.mubr.bf16.gmra.mrb[0].mxu0 %v2465
  %v2552 = vpop.f32.mrb[0].mxu0
  %v2553 = vadd.f32 %v2481, %v2552
  %v2554 = vpop.f32.mrb[0].mxu0
  %v2555 = vpop.f32.mrb[0].mxu0
  %v2556 = vadd.f32 %v2481, %v2555
  %v2557 = vpop.f32.mrb[0].mxu0
  %2558 = vmatprep.mubr.bf16.mxu0 0
  %2559 = vmatmul.mubr.bf16.gmra.mrb[0].mxu0 %v2466
  %v2560 = vpop.f32.mrb[0].mxu0
  %v2561 = vadd.f32 %v2481, %v2560
  %v2562 = vpop.f32.mrb[0].mxu0
  %v2563 = vpop.f32.mrb[0].mxu0
  %v2564 = vadd.f32 %v2481, %v2563
  %v2565 = vpop.f32.mrb[0].mxu0
  %2566 = vmatprep.mubr.bf16.mxu0 0
  %2567 = vmatmul.mubr.bf16.gmra.mrb[0].mxu0 %v2467
  %v2568 = vpop.f32.mrb[0].mxu0
  %v2569 = vadd.f32 %v2481, %v2568
  %v2570 = vpop.f32.mrb[0].mxu0
  %v2571 = vpop.f32.mrb[0].mxu0
  %v2572 = vadd.f32 %v2481, %v2571
  %v2573 = vpop.f32.mrb[0].mxu0
  %2574 = vmatprep.mubr.bf16.mxu0 0
  %2575 = vmatmul.mubr.bf16.gmra.mrb[0].mxu0 %v2468
  %v2576 = vpop.f32.mrb[0].mxu0
  %v2577 = vadd.f32 %v2481, %v2576
  %v2578 = vpop.f32.mrb[0].mxu0
  %v2579 = vpop.f32.mrb[0].mxu0
  %v2580 = vadd.f32 %v2481, %v2579
  %v2581 = vpop.f32.mrb[0].mxu0
  %2582 = vmatprep.mubr.bf16.mxu0 0
  %2583 = vmatmul.mubr.bf16.gmra.mrb[0].mxu0 %v2469
  %v2584 = vpop.f32.mrb[0].mxu0
  %v2585 = vadd.f32 %v2481, %v2584
  %v2586 = vpop.f32.mrb[0].mxu0
  %v2587 = vpop.f32.mrb[0].mxu0
  %v2588 = vadd.f32 %v2481, %v2587
  %v2589 = vpop.f32.mrb[0].mxu0
  %2590 = vmatprep.mubr.bf16.mxu0 0
  %2591 = vmatmul.mubr.bf16.gmra.mrb[0].mxu0 %v2470
  %v2592 = vpop.f32.mrb[0].mxu0
  %v2593 = vadd.f32 %v2481, %v2592
  %v2594 = vpop.f32.mrb[0].mxu0
  %v2595 = vpop.f32.mrb[0].mxu0
  %v2596 = vadd.f32 %v2481, %v2595
  %v2597 = vpop.f32.mrb[0].mxu0
  %2598 = vmatprep.mubr.bf16.mxu0 0
  %2599 = vmatmul.mubr.bf16.gmra.mrb[0].mxu0 %v2471
  %v2600 = vpop.f32.mrb[0].mxu0
  %v2601 = vadd.f32 %v2481, %v2600
  %v2602 = vpop.f32.mrb[0].mxu0
  %v2603 = vpop.f32.mrb[0].mxu0
  %v2604 = vadd.f32 %v2481, %v2603
  %v2605 = vpop.f32.mrb[0].mxu0
  %2606 = vmatprep.mubr.bf16.mxu0 0
  %2607 = vmatmul.mubr.bf16.gmra.mrb[0].mxu0 %v2472
  %v2608 = vpop.f32.mrb[0].mxu0
  %v2609 = vadd.f32 %v2481, %v2608
  %v2610 = vpop.f32.mrb[0].mxu0
  %v2611 = vpop.f32.mrb[0].mxu0
  %v2612 = vadd.f32 %v2481, %v2611
  %v2613 = vpop.f32.mrb[0].mxu0
  %2614 = vmatprep.mubr.bf16.mxu0 0
  %2615 = vmatmul.mubr.bf16.gmra.mrb[0].mxu0 %v2473
  %v2616 = vpop.f32.mrb[0].mxu0
  %v2617 = vadd.f32 %v2481, %v2616
  %v2618 = vpop.f32.mrb[0].mxu0
  %v2619 = vpop.f32.mrb[0].mxu0
  %v2620 = vadd.f32 %v2481, %v2619
  %v2621 = vpop.f32.mrb[0].mxu0
  %2622 = vmatprep.mubr.bf16.mxu0 0
  %2623 = vmatmul.mubr.bf16.gmra.mrb[0].mxu0 %v2474
  %v2624 = vpop.f32.mrb[0].mxu0
  %v2625 = vadd.f32 %v2481, %v2624
  %v2626 = vpop.f32.mrb[0].mxu0
  %v2627 = vpop.f32.mrb[0].mxu0
  %v2628 = vadd.f32 %v2481, %v2627
  %v2629 = vpop.f32.mrb[0].mxu0
  %2630 = vmatprep.mubr.bf16.mxu0 0
  %2631 = vmatmul.mubr.bf16.gmra.mrb[0].mxu0 %v2475
  %v2632 = vpop.f32.mrb[0].mxu0
  %v2633 = vadd.f32 %v2481, %v2632
  %v2634 = vpop.f32.mrb[0].mxu0
  %v2635 = vpop.f32.mrb[0].mxu0
  %v2636 = vadd.f32 %v2481, %v2635
  %v2637 = vpop.f32.mrb[0].mxu0
  %2638 = vmatprep.mubr.bf16.mxu0 0
  %2639 = vmatmul.mubr.bf16.gmra.mrb[0].mxu0 %v2476
  %v2640 = vpop.f32.mrb[0].mxu0
  %v2641 = vadd.f32 %v2481, %v2640
  %v2642 = vpop.f32.mrb[0].mxu0
  %v2643 = vpop.f32.mrb[0].mxu0
  %v2644 = vadd.f32 %v2481, %v2643
  %v2645 = vpop.f32.mrb[0].mxu0
  %2646 = vmatprep.mubr.bf16.mxu0 0
  %2647 = vmatmul.mubr.bf16.gmra.mrb[0].mxu0 %v2477
  %v2648 = vpop.f32.mrb[0].mxu0
  %v2649 = vadd.f32 %v2481, %v2648
  %v2650 = vpop.f32.mrb[0].mxu0
  %v2651 = vpop.f32.mrb[0].mxu0
  %v2652 = vadd.f32 %v2481, %v2651
  %v2653 = vpop.f32.mrb[0].mxu0
  %2654 = vdwg.mxu0
  %v2655 = vmul.f32 %v2529, 0.5
  %v2656 = vmul.f32 %v2532, 0.5
  %v2657 = vmul.f32 %v2537, 0.5
  %v2658 = vmul.f32 %v2540, 0.5
  %v2659 = vmul.f32 %v2545, 0.5
  %v2660 = vmul.f32 %v2548, 0.5
  %v2661 = vmul.f32 %v2553, 0.5
  %v2662 = vmul.f32 %v2556, 0.5
  %v2663 = vmul.f32 %v2561, 0.5
  %v2664 = vmul.f32 %v2564, 0.5
  %v2665 = vmul.f32 %v2569, 0.5
  %v2666 = vmul.f32 %v2572, 0.5
  %v2667 = vmul.f32 %v2577, 0.5
  %v2668 = vmul.f32 %v2580, 0.5
  %v2669 = vmul.f32 %v2585, 0.5
  %v2670 = vmul.f32 %v2588, 0.5
  %v2671 = vmul.f32 %v2593, 0.5
  %v2672 = vmul.f32 %v2596, 0.5
  %v2673 = vmul.f32 %v2601, 0.5
  %v2674 = vmul.f32 %v2604, 0.5
  %v2675 = vmul.f32 %v2609, 0.5
  %v2676 = vmul.f32 %v2612, 0.5
  %v2677 = vmul.f32 %v2617, 0.5
  %v2678 = vmul.f32 %v2620, 0.5
  %v2679 = vmul.f32 %v2625, 0.5
  %v2680 = vmul.f32 %v2628, 0.5
  %v2681 = vmul.f32 %v2633, 0.5
  %v2682 = vmul.f32 %v2636, 0.5
  %v2683 = vmul.f32 %v2641, 0.5
  %v2684 = vmul.f32 %v2644, 0.5
  %v2685 = vmul.f32 %v2649, 0.5
  %v2686 = vmul.f32 %v2652, 0.5
  %v2687 = vmul.f32 %v2529, 0.70710677
  %v2688 = vmul.f32 %v2532, 0.70710677
  %v2689 = vmul.f32 %v2537, 0.70710677
  %v2690 = vmul.f32 %v2540, 0.70710677
  %v2691 = vmul.f32 %v2545, 0.70710677
  %v2692 = vmul.f32 %v2548, 0.70710677
  %v2693 = vmul.f32 %v2553, 0.70710677
  %v2694 = vmul.f32 %v2556, 0.70710677
  %v2695 = vmul.f32 %v2561, 0.70710677
  %v2696 = vmul.f32 %v2564, 0.70710677
  %v2697 = vmul.f32 %v2569, 0.70710677
  %v2698 = vmul.f32 %v2572, 0.70710677
  %v2699 = vmul.f32 %v2577, 0.70710677
  %v2700 = vmul.f32 %v2580, 0.70710677
  %v2701 = vmul.f32 %v2585, 0.70710677
  %v2702 = vmul.f32 %v2588, 0.70710677
  %v2703 = vmul.f32 %v2593, 0.70710677
  %v2704 = vmul.f32 %v2596, 0.70710677
  %v2705 = vmul.f32 %v2601, 0.70710677
  %v2706 = vmul.f32 %v2604, 0.70710677
  %v2707 = vmul.f32 %v2609, 0.70710677
  %v2708 = vmul.f32 %v2612, 0.70710677
  %v2709 = vmul.f32 %v2617, 0.70710677
  %v2710 = vmul.f32 %v2620, 0.70710677
  %v2711 = vmul.f32 %v2625, 0.70710677
  %v2712 = vmul.f32 %v2628, 0.70710677
  %v2713 = vmul.f32 %v2633, 0.70710677
  %v2714 = vmul.f32 %v2636, 0.70710677
  %v2715 = vmul.f32 %v2641, 0.70710677
  %v2716 = vmul.f32 %v2644, 0.70710677
  %v2717 = vmul.f32 %v2649, 0.70710677
  %v2718 = vmul.f32 %v2652, 0.70710677
  %v2719 = verf.f32.pop %v2687
  %v2720 = verf.f32.pop %v2688
  %v2721 = verf.f32.pop %v2689
  %v2722 = verf.f32.pop %v2690
  %v2723 = verf.f32.pop %v2691
  %v2724 = verf.f32.pop %v2692
  %v2725 = verf.f32.pop %v2693
  %v2726 = verf.f32.pop %v2694
  %v2727 = verf.f32.pop %v2695
  %v2728 = verf.f32.pop %v2696
  %v2729 = verf.f32.pop %v2697
  %v2730 = verf.f32.pop %v2698
  %v2731 = verf.f32.pop %v2699
  %v2732 = verf.f32.pop %v2700
  %v2733 = verf.f32.pop %v2701
  %v2734 = verf.f32.pop %v2702
  %v2735 = verf.f32.pop %v2703
  %v2736 = verf.f32.pop %v2704
  %v2737 = verf.f32.pop %v2705
  %v2738 = verf.f32.pop %v2706
  %v2739 = verf.f32.pop %v2707
  %v2740 = verf.f32.pop %v2708
  %v2741 = verf.f32.pop %v2709
  %v2742 = verf.f32.pop %v2710
  %v2743 = verf.f32.pop %v2711
  %v2744 = verf.f32.pop %v2712
  %v2745 = verf.f32.pop %v2713
  %v2746 = verf.f32.pop %v2714
  %v2747 = verf.f32.pop %v2715
  %v2748 = verf.f32.pop %v2716
  %v2749 = verf.f32.pop %v2717
  %v2750 = verf.f32.pop %v2718
  %v2751 = vadd.f32 %v2719, 1.0
  %v2752 = vadd.f32 %v2720, 1.0
  %v2753 = vadd.f32 %v2721, 1.0
  %v2754 = vadd.f32 %v2722, 1.0
  %v2755 = vadd.f32 %v2723, 1.0
  %v2756 = vadd.f32 %v2724, 1.0
  %v2757 = vadd.f32 %v2725, 1.0
  %v2758 = vadd.f32 %v2726, 1.0
  %v2759 = vadd.f32 %v2727, 1.0
  %v2760 = vadd.f32 %v2728, 1.0
  %v2761 = vadd.f32 %v2729, 1.0
  %v2762 = vadd.f32 %v2730, 1.0
  %v2763 = vadd.f32 %v2731, 1.0
  %v2764 = vadd.f32 %v2732, 1.0
  %v2765 = vadd.f32 %v2733, 1.0
  %v2766 = vadd.f32 %v2734, 1.0
  %v2767 = vadd.f32 %v2735, 1.0
  %v2768 = vadd.f32 %v2736, 1.0
  %v2769 = vadd.f32 %v2737, 1.0
  %v2770 = vadd.f32 %v2738, 1.0
  %v2771 = vadd.f32 %v2739, 1.0
  %v2772 = vadd.f32 %v2740, 1.0
  %v2773 = vadd.f32 %v2741, 1.0
  %v2774 = vadd.f32 %v2742, 1.0
  %v2775 = vadd.f32 %v2743, 1.0
  %v2776 = vadd.f32 %v2744, 1.0
  %v2777 = vadd.f32 %v2745, 1.0
  %v2778 = vadd.f32 %v2746, 1.0
  %v2779 = vadd.f32 %v2747, 1.0
  %v2780 = vadd.f32 %v2748, 1.0
  %v2781 = vadd.f32 %v2749, 1.0
  %v2782 = vadd.f32 %v2750, 1.0
  %v2783 = vmul.f32 %v2655, %v2751
  %v2784 = vmul.f32 %v2656, %v2752
  %v2785 = vmul.f32 %v2657, %v2753
  %v2786 = vmul.f32 %v2658, %v2754
  %v2787 = vmul.f32 %v2659, %v2755
  %v2788 = vmul.f32 %v2660, %v2756
  %v2789 = vmul.f32 %v2661, %v2757
  %v2790 = vmul.f32 %v2662, %v2758
  %v2791 = vmul.f32 %v2663, %v2759
  %v2792 = vmul.f32 %v2664, %v2760
  %v2793 = vmul.f32 %v2665, %v2761
  %v2794 = vmul.f32 %v2666, %v2762
  %v2795 = vmul.f32 %v2667, %v2763
  %v2796 = vmul.f32 %v2668, %v2764
  %v2797 = vmul.f32 %v2669, %v2765
  %v2798 = vmul.f32 %v2670, %v2766
  %v2799 = vmul.f32 %v2671, %v2767
  %v2800 = vmul.f32 %v2672, %v2768
  %v2801 = vmul.f32 %v2673, %v2769
  %v2802 = vmul.f32 %v2674, %v2770
  %v2803 = vmul.f32 %v2675, %v2771
  %v2804 = vmul.f32 %v2676, %v2772
  %v2805 = vmul.f32 %v2677, %v2773
  %v2806 = vmul.f32 %v2678, %v2774
  %v2807 = vmul.f32 %v2679, %v2775
  %v2808 = vmul.f32 %v2680, %v2776
  %v2809 = vmul.f32 %v2681, %v2777
  %v2810 = vmul.f32 %v2682, %v2778
  %v2811 = vmul.f32 %v2683, %v2779
  %v2812 = vmul.f32 %v2684, %v2780
  %v2813 = vmul.f32 %v2685, %v2781
  %v2814 = vmul.f32 %v2686, %v2782
  %v2815 = vadd.f32 %v18, %v2783
  %v2816 = vadd.f32 %v19, %v2784
  %v2817 = vadd.f32 %v20, %v2785
  %v2818 = vadd.f32 %v21, %v2786
  %v2819 = vadd.f32 %v22, %v2787
  %v2820 = vadd.f32 %v23, %v2788
  %v2821 = vadd.f32 %v24, %v2789
  %v2822 = vadd.f32 %v25, %v2790
  %v2823 = vadd.f32 %v26, %v2791
  %v2824 = vadd.f32 %v27, %v2792
  %v2825 = vadd.f32 %v28, %v2793
  %v2826 = vadd.f32 %v29, %v2794
  %v2827 = vadd.f32 %v30, %v2795
  %v2828 = vadd.f32 %v31, %v2796
  %v2829 = vadd.f32 %v32, %v2797
  %v2830 = vadd.f32 %v33, %v2798
  %v2831 = vadd.f32 %v34, %v2799
  %v2832 = vadd.f32 %v35, %v2800
  %v2833 = vadd.f32 %v36, %v2801
  %v2834 = vadd.f32 %v37, %v2802
  %v2835 = vadd.f32 %v38, %v2803
  %v2836 = vadd.f32 %v39, %v2804
  %v2837 = vadd.f32 %v40, %v2805
  %v2838 = vadd.f32 %v41, %v2806
  %v2839 = vadd.f32 %v42, %v2807
  %v2840 = vadd.f32 %v43, %v2808
  %v2841 = vadd.f32 %v44, %v2809
  %v2842 = vadd.f32 %v45, %v2810
  %v2843 = vadd.f32 %v46, %v2811
  %v2844 = vadd.f32 %v47, %v2812
  %v2845 = vadd.f32 %v48, %v2813
  %v2846 = vadd.f32 %v49, %v2814
  %2847 = vst.msk [vmem:[%s4] sm:$0xff] %vm69, %v2815
  %2848 = vst.msk [vmem:[%s4 + $0x8] sm:$0xff] %vm69, %v2816
  %2849 = vst.msk [vmem:[%s4 + $0x10] sm:$0xff] %vm69, %v2817
  %2850 = vst.msk [vmem:[%s4 + $0x18] sm:$0xff] %vm69, %v2818
  %2851 = vst.msk [vmem:[%s4 + $0x20] sm:$0xff] %vm69, %v2819
  %2852 = vst.msk [vmem:[%s4 + $0x28] sm:$0xff] %vm69, %v2820
  %2853 = vst.msk [vmem:[%s4 + $0x30] sm:$0xff] %vm69, %v2821
  %2854 = vst.msk [vmem:[%s4 + $0x38] sm:$0xff] %vm69, %v2822
  %2855 = vst.msk [vmem:[%s4 + $0x40] sm:$0xff] %vm69, %v2823
  %2856 = vst.msk [vmem:[%s4 + $0x48] sm:$0xff] %vm69, %v2824
  %2857 = vst.msk [vmem:[%s4 + $0x50] sm:$0xff] %vm69, %v2825
  %2858 = vst.msk [vmem:[%s4 + $0x58] sm:$0xff] %vm69, %v2826
  %2859 = vst.msk [vmem:[%s4 + $0x60] sm:$0xff] %vm69, %v2827
  %2860 = vst.msk [vmem:[%s4 + $0x68] sm:$0xff] %vm69, %v2828
  %2861 = vst.msk [vmem:[%s4 + $0x70] sm:$0xff] %vm69, %v2829
  %2862 = vst.msk [vmem:[%s4 + $0x78] sm:$0xff] %vm69, %v2830
  %2863 = vst.msk [vmem:[%s4 + $0x80] sm:$0xff] %vm69, %v2831
  %2864 = vst.msk [vmem:[%s4 + $0x88] sm:$0xff] %vm69, %v2832
  %2865 = vst.msk [vmem:[%s4 + $0x90] sm:$0xff] %vm69, %v2833
  %2866 = vst.msk [vmem:[%s4 + $0x98] sm:$0xff] %vm69, %v2834
  %2867 = vst.msk [vmem:[%s4 + $0xa0] sm:$0xff] %vm69, %v2835
  %2868 = vst.msk [vmem:[%s4 + $0xa8] sm:$0xff] %vm69, %v2836
  %2869 = vst.msk [vmem:[%s4 + $0xb0] sm:$0xff] %vm69, %v2837
  %2870 = vst.msk [vmem:[%s4 + $0xb8] sm:$0xff] %vm69, %v2838
  %2871 = vst.msk [vmem:[%s4 + $0xc0] sm:$0xff] %vm69, %v2839
  %2872 = vst.msk [vmem:[%s4 + $0xc8] sm:$0xff] %vm69, %v2840
  %2873 = vst.msk [vmem:[%s4 + $0xd0] sm:$0xff] %vm69, %v2841
  %2874 = vst.msk [vmem:[%s4 + $0xd8] sm:$0xff] %vm69, %v2842
  %2875 = vst.msk [vmem:[%s4 + $0xe0] sm:$0xff] %vm69, %v2843
  %2876 = vst.msk [vmem:[%s4 + $0xe8] sm:$0xff] %vm69, %v2844
  %2877 = vst.msk [vmem:[%s4 + $0xf0] sm:$0xff] %vm69, %v2845
  %2878 = vst.msk [vmem:[%s4 + $0xf8] sm:$0xff] %vm69, %v2846
  // Predicated region
  $region18: #{graph_component_forward.1} parent=0 // pred_check
    _
  $region19: #{graph_component_forward.1} parent=0 // pred_check_branch
    %2880 = sbr.rel (0) target = $region21
  $region20: #{graph_component_forward.1} parent=0 // pred_region
    _
  $region21: #{graph_component_forward.1} parent=0 // pred_fallthru
    _
  // Predicated region
  $region22: #{graph_component_forward.1} parent=0 // pred_check
    _
  $region23: #{graph_component_forward.1} parent=0 // pred_check_branch
    %2882 = sbr.rel (0) target = $region25
  $region24: #{graph_component_forward.1} parent=0 // pred_region
    _
  $region25: #{graph_component_forward.1} parent=0 // pred_fallthru
    _

</llo_original>
